<compile_context>
chip_gen: v7x
topology: tpu7x:2x2x1
jax: 0.10.0
libtpu: 0.0.40
codegen_flags: <defaults>
</compile_context>

<pallas_src>
import functools

import jax
import jax.numpy as jnp
from jax import lax
from jax.experimental import pallas as pl
from jax.experimental.pallas import tpu as pltpu


# ---------------------------------------------------------------------------
# Packed-parameter slab layout (shared by prepare_params and the kernel).
# ---------------------------------------------------------------------------
def _slab_layout(I, H, O):
    """Row layout of the single (rows, 8H) f32 parameter slab.

    Every region starts on an 8-row boundary so in-kernel static slices stay
    sublane-tile aligned.  Returns (layout dict: name -> (row, nrows, ncols),
    total_rows, slab_width).
    """
    def r8(n):
        return (n + 7) // 8 * 8

    regions = [
        ("wih0",  I,   4 * H),  # layer-0 input weights, cols [i,f,o,g], i/f/o *0.5
        ("b0",    1,   4 * H),  # layer-0 folded bias (b_ih + b_hh)
        ("w0f",   H,   8 * H),  # fused [whh0 | wih1]: shared-LHS h0 matmul
        ("whh1",  H,   4 * H),  # layer-1 recurrent weights
        ("b1",    1,   4 * H),  # layer-1 folded bias
        ("ln_g",  1,   H),
        ("ln_b",  1,   H),
        ("fc1_w", H,   64),
        ("fc1_b", 1,   64),
        ("fc2_w", 64,  32),
        ("fc2_b", 1,   32),
        ("fc3_w", 32,  O),
        ("fc3_b", 1,   O),
    ]
    layout = {}
    row = 0
    for name, nr, nc in regions:
        layout[name] = (row, nr, nc)
        row += r8(nr)
    return layout, r8(row), 8 * H


def _gates_to_hc(gates, c, H):
    """LSTM cell pointwise ops.

    Gate columns are ordered [i, f, o, g]; the i/f/o pre-activations were
    pre-scaled by 0.5 in the packed weights, so sigmoid(x) = 0.5*tanh(x/2)+0.5
    falls out of ONE full-width tanh (2 EUP pushes per cell instead of 4).
    """
    t = jnp.tanh(gates)                       # one EUP pass over all 4H lanes
    i = 0.5 * t[:, 0 * H:1 * H] + 0.5
    f = 0.5 * t[:, 1 * H:2 * H] + 0.5
    o = 0.5 * t[:, 2 * H:3 * H] + 0.5
    g = t[:, 3 * H:4 * H]
    c_new = f * c + i * g
    h_new = o * jnp.tanh(c_new)               # second EUP pass (H lanes)
    return h_new, c_new


# ---------------------------------------------------------------------------
# Kernel: gridless, everything resident in VMEM (<300 KiB working set).
# ---------------------------------------------------------------------------
def lstm2_forecast_kernel(x_ref, w_ref, out_ref):
    TB, I = x_ref.shape
    B, O = out_ref.shape
    T = TB // B
    H = w_ref.shape[1] // 8
    layout, _, _ = _slab_layout(I, H, O)

    def get(name):
        row, nr, nc = layout[name]
        return w_ref[row:row + nr, :nc]       # static, 8-row-aligned slice

    wih0 = get("wih0")
    b0 = get("b0")
    w0f = get("w0f")                          # (H, 8H) = [whh0 | wih1]
    whh1 = get("whh1")
    b1 = get("b1")

    # Hoisted layer-0 input projection for all T steps: one MXU pass.
    gx = jnp.dot(x_ref[...], wih0, preferred_element_type=jnp.float32) + b0  # (T*B, 4H)

    zeros = jnp.zeros((B, H), jnp.float32)
    h1, c0, c1 = zeros, zeros, zeros
    rec0 = jnp.zeros((B, 4 * H), jnp.float32)  # h0_{t-1} @ whh0 (zero at t=0)

    # T is small & static: fully unroll so independent work across steps
    # (layer-1 of step t, layer-0 of step t+1) can overlap.
    for t in range(T):
        # Layer-1 recurrent term: depends only on h1 from step t-1, so it is
        # off the h0(t) critical path.
        rec1 = jnp.dot(h1, whh1, preferred_element_type=jnp.float32)

        # Layer 0, step t: only the (already computed) recurrent term is on
        # the serial chain.
        h0, c0 = _gates_to_hc(gx[t * B:(t + 1) * B, :] + rec0, c0, H)

        # Single 256-wide matmul shared by layer-0(t+1) recurrence and the
        # layer-1(t) input projection (native single pass on v6e/v7x MXU).
        fused = jnp.dot(h0, w0f, preferred_element_type=jnp.float32)  # (B, 8H)
        rec0 = fused[:, :4 * H]

        # Layer 1, step t.
        h1, c1 = _gates_to_hc(fused[:, 4 * H:] + rec1 + b1, c1, H)

    # LayerNorm over the hidden dim (per-timestep op, so only the last step's
    # hidden state is needed for the dense head).
    mean = jnp.mean(h1, axis=-1, keepdims=True)
    var = jnp.mean((h1 - mean) ** 2, axis=-1, keepdims=True)
    y = (h1 - mean) * lax.rsqrt(var + 1e-5) * get("ln_g") + get("ln_b")

    # Dense head: fc1 -> ReLU -> fc2 -> ReLU -> fc3
    d1 = jnp.dot(y, get("fc1_w"), preferred_element_type=jnp.float32) + get("fc1_b")
    d1 = jnp.maximum(d1, 0.0)
    d2 = jnp.dot(d1, get("fc2_w"), preferred_element_type=jnp.float32) + get("fc2_b")
    d2 = jnp.maximum(d2, 0.0)
    out = jnp.dot(d2, get("fc3_w"), preferred_element_type=jnp.float32) + get("fc3_b")
    out_ref[...] = out.astype(out_ref.dtype)


# ---------------------------------------------------------------------------
# One-time parameter packing (NOT on the per-call hot path).
# ---------------------------------------------------------------------------
def prepare_params(params):
    """Pack PyTorch-layout params into a single f32 slab. Call once."""
    p = params
    H = p["w_hh0"].shape[1]
    I = p["w_ih0"].shape[1]
    O = p["fc3_w"].shape[0]

    def perm(w):      # reorder (in, 4H) gate cols from [i,f,g,o] -> [i,f,o,g]
        return jnp.concatenate([w[:, :2 * H], w[:, 3 * H:], w[:, 2 * H:3 * H]], axis=1)

    def half_ifo(w):  # pre-scale i/f/o gate columns by 0.5 (sigmoid via tanh)
        return jnp.concatenate([0.5 * w[:, :3 * H], w[:, 3 * H:]], axis=1)

    wih0 = half_ifo(perm(p["w_ih0"].T))
    whh0 = half_ifo(perm(p["w_hh0"].T))
    b0 = half_ifo(perm((p["b_ih0"] + p["b_hh0"]).reshape(1, -1)))
    wih1 = half_ifo(perm(p["w_ih1"].T))
    whh1 = half_ifo(perm(p["w_hh1"].T))
    b1 = half_ifo(perm((p["b_ih1"] + p["b_hh1"]).reshape(1, -1)))
    w0f = jnp.concatenate([whh0, wih1], axis=1)   # (H, 8H): shared-LHS fusion

    parts = dict(
        wih0=wih0, b0=b0, w0f=w0f, whh1=whh1, b1=b1,
        ln_g=p["ln_g"].reshape(1, -1), ln_b=p["ln_b"].reshape(1, -1),
        fc1_w=p["fc1_w"].T, fc1_b=p["fc1_b"].reshape(1, -1),
        fc2_w=p["fc2_w"].T, fc2_b=p["fc2_b"].reshape(1, -1),
        fc3_w=p["fc3_w"].T, fc3_b=p["fc3_b"].reshape(1, -1),
    )
    layout, rows, width = _slab_layout(I, H, O)
    slab = jnp.zeros((rows, width), jnp.float32)
    for name, (row, nr, nc) in layout.items():
        slab = slab.at[row:row + nr, :nc].set(parts[name].astype(jnp.float32))
    return slab


# ---------------------------------------------------------------------------
# Hot-path wrapper: only transposes/reshapes x; weights are prepacked.
# ---------------------------------------------------------------------------
@functools.partial(jax.jit, static_argnames=("output_size",))
def lstm2_forecast(x, param_slab, *, output_size):
    """x: (B, T, input_size) batch-first, like the PyTorch module."""
    B, T, I = x.shape
    x2d = jnp.transpose(x, (1, 0, 2)).reshape(T * B, I)   # time-major, flat

    # TODO(synk): if multiple independent series are served, stack them into a
    # larger batch (B >= 8, ideally up to 128/256) before this call — per-step
    # latency is unchanged, so throughput scales ~linearly with B. On v7x, if
    # batching is impossible, split B over a 2-wide "parallel" grid to use
    # both TensorCores.
    vmem = pl.BlockSpec(memory_space=pltpu.MemorySpace.VMEM)
    return pl.pallas_call(
        lstm2_forecast_kernel,
        out_shape=jax.ShapeDtypeStruct((B, output_size), jnp.float32),
        in_specs=[vmem, vmem],
        out_specs=vmem,
    )(x2d, param_slab)


# ---------------------------------------------------------------------------
# Deterministic synthetic init + pure-JAX reference (PyTorch semantics).
# ---------------------------------------------------------------------------
def init_params(key, input_size, hidden_size, output_size):
    """PyTorch-style uniform +-1/sqrt(H) init, PyTorch weight layouts."""
    H = hidden_size
    k = 1.0 / jnp.sqrt(jnp.float32(H))
    keys = jax.random.split(key, 20)

    def u(k_, shape):
        return jax.random.uniform(k_, shape, jnp.float32, -k, k)

    return dict(
        w_ih0=u(keys[0], (4 * H, input_size)),
        w_hh0=u(keys[1], (4 * H, H)),
        b_ih0=u(keys[2], (4 * H,)),
        b_hh0=u(keys[3], (4 * H,)),
        w_ih1=u(keys[4], (4 * H, H)),
        w_hh1=u(keys[5], (4 * H, H)),
        b_ih1=u(keys[6], (4 * H,)),
        b_hh1=u(keys[7], (4 * H,)),
        ln_g=jnp.ones((H,), jnp.float32),
        ln_b=jnp.zeros((H,), jnp.float32),
        fc1_w=u(keys[8], (64, H)),
        fc1_b=u(keys[9], (64,)),
        fc2_w=u(keys[10], (32, 64)),
        fc2_b=u(keys[11], (32,)),
        fc3_w=u(keys[12], (output_size, 32)),
        fc3_b=u(keys[13], (output_size,)),
    )


def reference_forward(x, params, output_size):
    """Pure-JAX reference replicating the PyTorch forward (eval mode)."""
    B, T, I = x.shape
    H = params["w_hh0"].shape[1]
    p = params

    def cell(x_t, h, c, w_ih, w_hh, b_ih, b_hh):
        gates = x_t @ w_ih.T + b_ih + h @ w_hh.T + b_hh
        i = jax.nn.sigmoid(gates[:, 0 * H:1 * H])
        f = jax.nn.sigmoid(gates[:, 1 * H:2 * H])
        g = jnp.tanh(gates[:, 2 * H:3 * H])
        o = jax.nn.sigmoid(gates[:, 3 * H:4 * H])
        c = f * c + i * g
        h = o * jnp.tanh(c)
        return h, c

    h0 = c0 = h1 = c1 = jnp.zeros((B, H), jnp.float32)
    for t in range(T):
        h0, c0 = cell(x[:, t, :], h0, c0, p["w_ih0"], p["w_hh0"], p["b_ih0"], p["b_hh0"])
        h1, c1 = cell(h0, h1, c1, p["w_ih1"], p["w_hh1"], p["b_ih1"], p["b_hh1"])

    mean = jnp.mean(h1, axis=-1, keepdims=True)
    var = jnp.mean((h1 - mean) ** 2, axis=-1, keepdims=True)
    y = (h1 - mean) / jnp.sqrt(var + 1e-5) * p["ln_g"] + p["ln_b"]
    d1 = jnp.maximum(y @ p["fc1_w"].T + p["fc1_b"], 0.0)
    d2 = jnp.maximum(d1 @ p["fc2_w"].T + p["fc2_b"], 0.0)
    return d2 @ p["fc3_w"].T + p["fc3_b"]


if __name__ == "__main__":
    batch, look_back, input_size = 2, 8, 4
    hidden_size, num_layers, output_size = 32, 2, 4   # num_layers=2 hard-coded

    key = jax.random.PRNGKey(0)
    kx, kp = jax.random.split(key)
    x = jax.random.normal(kx, (batch, look_back, input_size), jnp.float32)
    params = init_params(kp, input_size, hidden_size, output_size)

    # One-time weight packing (outside the hot path).
    param_slab = jax.block_until_ready(prepare_params(params))

    out = lstm2_forecast(x, param_slab, output_size=output_size)
    out = jax.block_until_ready(out)

    ref = reference_forward(x, params, output_size)
    assert out.shape == (batch, output_size)
    assert jnp.allclose(out, ref, atol=1e-4, rtol=1e-4), (out, ref)

    print("KERNEL_OK")
</pallas_src>

<mosaic_0001>
module attributes {stable_mosaic.version = 11 : i64} {
  func.func @lstm2_forecast_kernel(%arg0: memref<16x4xf32, #tpu.memory_space<vmem>>, %arg1: memref<256x256xf32, #tpu.memory_space<vmem>>, %arg2: memref<2x4xf32, #tpu.memory_space<vmem>>) attributes {dimension_semantics = [], scalar_prefetch = 0 : i64, scratch_operands = 0 : i64, tpu.core_type = #tpu.core_type<tc>} {
    %c0 = arith.constant 0 : index
    %c0_0 = arith.constant 0 : index
    %0 = vector.load %arg1[%c0, %c0_0] : memref<256x256xf32, #tpu.memory_space<vmem>>, vector<4x128xf32>
    %c8 = arith.constant 8 : index
    %c0_1 = arith.constant 0 : index
    %1 = vector.load %arg1[%c8, %c0_1] : memref<256x256xf32, #tpu.memory_space<vmem>>, vector<1x128xf32>
    %c16 = arith.constant 16 : index
    %c0_2 = arith.constant 0 : index
    %2 = vector.load %arg1[%c16, %c0_2] : memref<256x256xf32, #tpu.memory_space<vmem>>, vector<32x256xf32>
    %c48 = arith.constant 48 : index
    %c0_3 = arith.constant 0 : index
    %3 = vector.load %arg1[%c48, %c0_3] : memref<256x256xf32, #tpu.memory_space<vmem>>, vector<32x128xf32>
    %c80 = arith.constant 80 : index
    %c0_4 = arith.constant 0 : index
    %4 = vector.load %arg1[%c80, %c0_4] : memref<256x256xf32, #tpu.memory_space<vmem>>, vector<1x128xf32>
    %c0_5 = arith.constant 0 : index
    %c0_6 = arith.constant 0 : index
    %5 = vector.load %arg0[%c0_5, %c0_6] : memref<16x4xf32, #tpu.memory_space<vmem>>, vector<16x4xf32>
    %cst = arith.constant dense<0.000000e+00> : vector<16x128xf32>
    %6 = tpu.matmul %5, %0, %cst {dimension_numbers = #tpu.dot_dimension_numbers<[1], [0], [0], [1], [0, 0, 1, 1], [], []>} : vector<16x4xf32>, vector<4x128xf32>, vector<16x128xf32> -> vector<16x128xf32>
    %7 = vector.broadcast %1 : vector<1x128xf32> to vector<16x128xf32>
    %8 = arith.addf %6, %7 : vector<16x128xf32>
    %cst_7 = arith.constant 0.000000e+00 : f32
    %9 = vector.broadcast %cst_7 : f32 to vector<2x32xf32>
    %cst_8 = arith.constant 0.000000e+00 : f32
    %10 = vector.broadcast %cst_8 : f32 to vector<2x128xf32>
    %cst_9 = arith.constant dense<0.000000e+00> : vector<2x128xf32>
    %11 = tpu.matmul %9, %3, %cst_9 {dimension_numbers = #tpu.dot_dimension_numbers<[1], [0], [0], [1], [0, 0, 1, 1], [], []>} : vector<2x32xf32>, vector<32x128xf32>, vector<2x128xf32> -> vector<2x128xf32>
    %12 = vector.extract_strided_slice %8 {offsets = [0, 0], sizes = [2, 128], strides = [1, 1]} : vector<16x128xf32> to vector<2x128xf32>
    %13 = arith.addf %12, %10 : vector<2x128xf32>
    %14 = math.tanh %13 : vector<2x128xf32>
    %15 = vector.extract_strided_slice %14 {offsets = [0, 0], sizes = [2, 32], strides = [1, 1]} : vector<2x128xf32> to vector<2x32xf32>
    %cst_10 = arith.constant 5.000000e-01 : f32
    %16 = vector.broadcast %cst_10 : f32 to vector<2x32xf32>
    %17 = arith.mulf %16, %15 : vector<2x32xf32>
    %cst_11 = arith.constant 5.000000e-01 : f32
    %18 = vector.broadcast %cst_11 : f32 to vector<2x32xf32>
    %19 = arith.addf %17, %18 : vector<2x32xf32>
    %20 = vector.extract_strided_slice %14 {offsets = [0, 32], sizes = [2, 32], strides = [1, 1]} : vector<2x128xf32> to vector<2x32xf32>
    %cst_12 = arith.constant 5.000000e-01 : f32
    %21 = vector.broadcast %cst_12 : f32 to vector<2x32xf32>
    %22 = arith.mulf %21, %20 : vector<2x32xf32>
    %cst_13 = arith.constant 5.000000e-01 : f32
    %23 = vector.broadcast %cst_13 : f32 to vector<2x32xf32>
    %24 = arith.addf %22, %23 : vector<2x32xf32>
    %25 = vector.extract_strided_slice %14 {offsets = [0, 64], sizes = [2, 32], strides = [1, 1]} : vector<2x128xf32> to vector<2x32xf32>
    %cst_14 = arith.constant 5.000000e-01 : f32
    %26 = vector.broadcast %cst_14 : f32 to vector<2x32xf32>
    %27 = arith.mulf %26, %25 : vector<2x32xf32>
    %cst_15 = arith.constant 5.000000e-01 : f32
    %28 = vector.broadcast %cst_15 : f32 to vector<2x32xf32>
    %29 = arith.addf %27, %28 : vector<2x32xf32>
    %30 = vector.extract_strided_slice %14 {offsets = [0, 96], sizes = [2, 32], strides = [1, 1]} : vector<2x128xf32> to vector<2x32xf32>
    %31 = arith.mulf %24, %9 : vector<2x32xf32>
    %32 = arith.mulf %19, %30 : vector<2x32xf32>
    %33 = arith.addf %31, %32 : vector<2x32xf32>
    %34 = math.tanh %33 : vector<2x32xf32>
    %35 = arith.mulf %29, %34 : vector<2x32xf32>
    %cst_16 = arith.constant dense<0.000000e+00> : vector<2x256xf32>
    %36 = tpu.matmul %35, %2, %cst_16 {dimension_numbers = #tpu.dot_dimension_numbers<[1], [0], [0], [1], [0, 0, 1, 1], [], []>} : vector<2x32xf32>, vector<32x256xf32>, vector<2x256xf32> -> vector<2x256xf32>
    %37 = vector.extract_strided_slice %36 {offsets = [0, 0], sizes = [2, 128], strides = [1, 1]} : vector<2x256xf32> to vector<2x128xf32>
    %38 = vector.extract_strided_slice %36 {offsets = [0, 128], sizes = [2, 128], strides = [1, 1]} : vector<2x256xf32> to vector<2x128xf32>
    %39 = arith.addf %38, %11 : vector<2x128xf32>
    %40 = vector.broadcast %4 : vector<1x128xf32> to vector<2x128xf32>
    %41 = arith.addf %39, %40 : vector<2x128xf32>
    %42 = math.tanh %41 : vector<2x128xf32>
    %43 = vector.extract_strided_slice %42 {offsets = [0, 0], sizes = [2, 32], strides = [1, 1]} : vector<2x128xf32> to vector<2x32xf32>
    %cst_17 = arith.constant 5.000000e-01 : f32
    %44 = vector.broadcast %cst_17 : f32 to vector<2x32xf32>
    %45 = arith.mulf %44, %43 : vector<2x32xf32>
    %cst_18 = arith.constant 5.000000e-01 : f32
    %46 = vector.broadcast %cst_18 : f32 to vector<2x32xf32>
    %47 = arith.addf %45, %46 : vector<2x32xf32>
    %48 = vector.extract_strided_slice %42 {offsets = [0, 32], sizes = [2, 32], strides = [1, 1]} : vector<2x128xf32> to vector<2x32xf32>
    %cst_19 = arith.constant 5.000000e-01 : f32
    %49 = vector.broadcast %cst_19 : f32 to vector<2x32xf32>
    %50 = arith.mulf %49, %48 : vector<2x32xf32>
    %cst_20 = arith.constant 5.000000e-01 : f32
    %51 = vector.broadcast %cst_20 : f32 to vector<2x32xf32>
    %52 = arith.addf %50, %51 : vector<2x32xf32>
    %53 = vector.extract_strided_slice %42 {offsets = [0, 64], sizes = [2, 32], strides = [1, 1]} : vector<2x128xf32> to vector<2x32xf32>
    %cst_21 = arith.constant 5.000000e-01 : f32
    %54 = vector.broadcast %cst_21 : f32 to vector<2x32xf32>
    %55 = arith.mulf %54, %53 : vector<2x32xf32>
    %cst_22 = arith.constant 5.000000e-01 : f32
    %56 = vector.broadcast %cst_22 : f32 to vector<2x32xf32>
    %57 = arith.addf %55, %56 : vector<2x32xf32>
    %58 = vector.extract_strided_slice %42 {offsets = [0, 96], sizes = [2, 32], strides = [1, 1]} : vector<2x128xf32> to vector<2x32xf32>
    %59 = arith.mulf %52, %9 : vector<2x32xf32>
    %60 = arith.mulf %47, %58 : vector<2x32xf32>
    %61 = arith.addf %59, %60 : vector<2x32xf32>
    %62 = math.tanh %61 : vector<2x32xf32>
    %63 = arith.mulf %57, %62 : vector<2x32xf32>
    %cst_23 = arith.constant dense<0.000000e+00> : vector<2x128xf32>
    %64 = tpu.matmul %63, %3, %cst_23 {dimension_numbers = #tpu.dot_dimension_numbers<[1], [0], [0], [1], [0, 0, 1, 1], [], []>} : vector<2x32xf32>, vector<32x128xf32>, vector<2x128xf32> -> vector<2x128xf32>
    %65 = vector.extract_strided_slice %8 {offsets = [2, 0], sizes = [2, 128], strides = [1, 1]} : vector<16x128xf32> to vector<2x128xf32>
    %66 = arith.addf %65, %37 : vector<2x128xf32>
    %67 = math.tanh %66 : vector<2x128xf32>
    %68 = vector.extract_strided_slice %67 {offsets = [0, 0], sizes = [2, 32], strides = [1, 1]} : vector<2x128xf32> to vector<2x32xf32>
    %cst_24 = arith.constant 5.000000e-01 : f32
    %69 = vector.broadcast %cst_24 : f32 to vector<2x32xf32>
    %70 = arith.mulf %69, %68 : vector<2x32xf32>
    %cst_25 = arith.constant 5.000000e-01 : f32
    %71 = vector.broadcast %cst_25 : f32 to vector<2x32xf32>
    %72 = arith.addf %70, %71 : vector<2x32xf32>
    %73 = vector.extract_strided_slice %67 {offsets = [0, 32], sizes = [2, 32], strides = [1, 1]} : vector<2x128xf32> to vector<2x32xf32>
    %cst_26 = arith.constant 5.000000e-01 : f32
    %74 = vector.broadcast %cst_26 : f32 to vector<2x32xf32>
    %75 = arith.mulf %74, %73 : vector<2x32xf32>
    %cst_27 = arith.constant 5.000000e-01 : f32
    %76 = vector.broadcast %cst_27 : f32 to vector<2x32xf32>
    %77 = arith.addf %75, %76 : vector<2x32xf32>
    %78 = vector.extract_strided_slice %67 {offsets = [0, 64], sizes = [2, 32], strides = [1, 1]} : vector<2x128xf32> to vector<2x32xf32>
    %cst_28 = arith.constant 5.000000e-01 : f32
    %79 = vector.broadcast %cst_28 : f32 to vector<2x32xf32>
    %80 = arith.mulf %79, %78 : vector<2x32xf32>
    %cst_29 = arith.constant 5.000000e-01 : f32
    %81 = vector.broadcast %cst_29 : f32 to vector<2x32xf32>
    %82 = arith.addf %80, %81 : vector<2x32xf32>
    %83 = vector.extract_strided_slice %67 {offsets = [0, 96], sizes = [2, 32], strides = [1, 1]} : vector<2x128xf32> to vector<2x32xf32>
    %84 = arith.mulf %77, %33 : vector<2x32xf32>
    %85 = arith.mulf %72, %83 : vector<2x32xf32>
    %86 = arith.addf %84, %85 : vector<2x32xf32>
    %87 = math.tanh %86 : vector<2x32xf32>
    %88 = arith.mulf %82, %87 : vector<2x32xf32>
    %cst_30 = arith.constant dense<0.000000e+00> : vector<2x256xf32>
    %89 = tpu.matmul %88, %2, %cst_30 {dimension_numbers = #tpu.dot_dimension_numbers<[1], [0], [0], [1], [0, 0, 1, 1], [], []>} : vector<2x32xf32>, vector<32x256xf32>, vector<2x256xf32> -> vector<2x256xf32>
    %90 = vector.extract_strided_slice %89 {offsets = [0, 0], sizes = [2, 128], strides = [1, 1]} : vector<2x256xf32> to vector<2x128xf32>
    %91 = vector.extract_strided_slice %89 {offsets = [0, 128], sizes = [2, 128], strides = [1, 1]} : vector<2x256xf32> to vector<2x128xf32>
    %92 = arith.addf %91, %64 : vector<2x128xf32>
    %93 = vector.broadcast %4 : vector<1x128xf32> to vector<2x128xf32>
    %94 = arith.addf %92, %93 : vector<2x128xf32>
    %95 = math.tanh %94 : vector<2x128xf32>
    %96 = vector.extract_strided_slice %95 {offsets = [0, 0], sizes = [2, 32], strides = [1, 1]} : vector<2x128xf32> to vector<2x32xf32>
    %cst_31 = arith.constant 5.000000e-01 : f32
    %97 = vector.broadcast %cst_31 : f32 to vector<2x32xf32>
    %98 = arith.mulf %97, %96 : vector<2x32xf32>
    %cst_32 = arith.constant 5.000000e-01 : f32
    %99 = vector.broadcast %cst_32 : f32 to vector<2x32xf32>
    %100 = arith.addf %98, %99 : vector<2x32xf32>
    %101 = vector.extract_strided_slice %95 {offsets = [0, 32], sizes = [2, 32], strides = [1, 1]} : vector<2x128xf32> to vector<2x32xf32>
    %cst_33 = arith.constant 5.000000e-01 : f32
    %102 = vector.broadcast %cst_33 : f32 to vector<2x32xf32>
    %103 = arith.mulf %102, %101 : vector<2x32xf32>
    %cst_34 = arith.constant 5.000000e-01 : f32
    %104 = vector.broadcast %cst_34 : f32 to vector<2x32xf32>
    %105 = arith.addf %103, %104 : vector<2x32xf32>
    %106 = vector.extract_strided_slice %95 {offsets = [0, 64], sizes = [2, 32], strides = [1, 1]} : vector<2x128xf32> to vector<2x32xf32>
    %cst_35 = arith.constant 5.000000e-01 : f32
    %107 = vector.broadcast %cst_35 : f32 to vector<2x32xf32>
    %108 = arith.mulf %107, %106 : vector<2x32xf32>
    %cst_36 = arith.constant 5.000000e-01 : f32
    %109 = vector.broadcast %cst_36 : f32 to vector<2x32xf32>
    %110 = arith.addf %108, %109 : vector<2x32xf32>
    %111 = vector.extract_strided_slice %95 {offsets = [0, 96], sizes = [2, 32], strides = [1, 1]} : vector<2x128xf32> to vector<2x32xf32>
    %112 = arith.mulf %105, %61 : vector<2x32xf32>
    %113 = arith.mulf %100, %111 : vector<2x32xf32>
    %114 = arith.addf %112, %113 : vector<2x32xf32>
    %115 = math.tanh %114 : vector<2x32xf32>
    %116 = arith.mulf %110, %115 : vector<2x32xf32>
    %cst_37 = arith.constant dense<0.000000e+00> : vector<2x128xf32>
    %117 = tpu.matmul %116, %3, %cst_37 {dimension_numbers = #tpu.dot_dimension_numbers<[1], [0], [0], [1], [0, 0, 1, 1], [], []>} : vector<2x32xf32>, vector<32x128xf32>, vector<2x128xf32> -> vector<2x128xf32>
    %118 = vector.extract_strided_slice %8 {offsets = [4, 0], sizes = [2, 128], strides = [1, 1]} : vector<16x128xf32> to vector<2x128xf32>
    %119 = arith.addf %118, %90 : vector<2x128xf32>
    %120 = math.tanh %119 : vector<2x128xf32>
    %121 = vector.extract_strided_slice %120 {offsets = [0, 0], sizes = [2, 32], strides = [1, 1]} : vector<2x128xf32> to vector<2x32xf32>
    %cst_38 = arith.constant 5.000000e-01 : f32
    %122 = vector.broadcast %cst_38 : f32 to vector<2x32xf32>
    %123 = arith.mulf %122, %121 : vector<2x32xf32>
    %cst_39 = arith.constant 5.000000e-01 : f32
    %124 = vector.broadcast %cst_39 : f32 to vector<2x32xf32>
    %125 = arith.addf %123, %124 : vector<2x32xf32>
    %126 = vector.extract_strided_slice %120 {offsets = [0, 32], sizes = [2, 32], strides = [1, 1]} : vector<2x128xf32> to vector<2x32xf32>
    %cst_40 = arith.constant 5.000000e-01 : f32
    %127 = vector.broadcast %cst_40 : f32 to vector<2x32xf32>
    %128 = arith.mulf %127, %126 : vector<2x32xf32>
    %cst_41 = arith.constant 5.000000e-01 : f32
    %129 = vector.broadcast %cst_41 : f32 to vector<2x32xf32>
    %130 = arith.addf %128, %129 : vector<2x32xf32>
    %131 = vector.extract_strided_slice %120 {offsets = [0, 64], sizes = [2, 32], strides = [1, 1]} : vector<2x128xf32> to vector<2x32xf32>
    %cst_42 = arith.constant 5.000000e-01 : f32
    %132 = vector.broadcast %cst_42 : f32 to vector<2x32xf32>
    %133 = arith.mulf %132, %131 : vector<2x32xf32>
    %cst_43 = arith.constant 5.000000e-01 : f32
    %134 = vector.broadcast %cst_43 : f32 to vector<2x32xf32>
    %135 = arith.addf %133, %134 : vector<2x32xf32>
    %136 = vector.extract_strided_slice %120 {offsets = [0, 96], sizes = [2, 32], strides = [1, 1]} : vector<2x128xf32> to vector<2x32xf32>
    %137 = arith.mulf %130, %86 : vector<2x32xf32>
    %138 = arith.mulf %125, %136 : vector<2x32xf32>
    %139 = arith.addf %137, %138 : vector<2x32xf32>
    %140 = math.tanh %139 : vector<2x32xf32>
    %141 = arith.mulf %135, %140 : vector<2x32xf32>
    %cst_44 = arith.constant dense<0.000000e+00> : vector<2x256xf32>
    %142 = tpu.matmul %141, %2, %cst_44 {dimension_numbers = #tpu.dot_dimension_numbers<[1], [0], [0], [1], [0, 0, 1, 1], [], []>} : vector<2x32xf32>, vector<32x256xf32>, vector<2x256xf32> -> vector<2x256xf32>
    %143 = vector.extract_strided_slice %142 {offsets = [0, 0], sizes = [2, 128], strides = [1, 1]} : vector<2x256xf32> to vector<2x128xf32>
    %144 = vector.extract_strided_slice %142 {offsets = [0, 128], sizes = [2, 128], strides = [1, 1]} : vector<2x256xf32> to vector<2x128xf32>
    %145 = arith.addf %144, %117 : vector<2x128xf32>
    %146 = vector.broadcast %4 : vector<1x128xf32> to vector<2x128xf32>
    %147 = arith.addf %145, %146 : vector<2x128xf32>
    %148 = math.tanh %147 : vector<2x128xf32>
    %149 = vector.extract_strided_slice %148 {offsets = [0, 0], sizes = [2, 32], strides = [1, 1]} : vector<2x128xf32> to vector<2x32xf32>
    %cst_45 = arith.constant 5.000000e-01 : f32
    %150 = vector.broadcast %cst_45 : f32 to vector<2x32xf32>
    %151 = arith.mulf %150, %149 : vector<2x32xf32>
    %cst_46 = arith.constant 5.000000e-01 : f32
    %152 = vector.broadcast %cst_46 : f32 to vector<2x32xf32>
    %153 = arith.addf %151, %152 : vector<2x32xf32>
    %154 = vector.extract_strided_slice %148 {offsets = [0, 32], sizes = [2, 32], strides = [1, 1]} : vector<2x128xf32> to vector<2x32xf32>
    %cst_47 = arith.constant 5.000000e-01 : f32
    %155 = vector.broadcast %cst_47 : f32 to vector<2x32xf32>
    %156 = arith.mulf %155, %154 : vector<2x32xf32>
    %cst_48 = arith.constant 5.000000e-01 : f32
    %157 = vector.broadcast %cst_48 : f32 to vector<2x32xf32>
    %158 = arith.addf %156, %157 : vector<2x32xf32>
    %159 = vector.extract_strided_slice %148 {offsets = [0, 64], sizes = [2, 32], strides = [1, 1]} : vector<2x128xf32> to vector<2x32xf32>
    %cst_49 = arith.constant 5.000000e-01 : f32
    %160 = vector.broadcast %cst_49 : f32 to vector<2x32xf32>
    %161 = arith.mulf %160, %159 : vector<2x32xf32>
    %cst_50 = arith.constant 5.000000e-01 : f32
    %162 = vector.broadcast %cst_50 : f32 to vector<2x32xf32>
    %163 = arith.addf %161, %162 : vector<2x32xf32>
    %164 = vector.extract_strided_slice %148 {offsets = [0, 96], sizes = [2, 32], strides = [1, 1]} : vector<2x128xf32> to vector<2x32xf32>
    %165 = arith.mulf %158, %114 : vector<2x32xf32>
    %166 = arith.mulf %153, %164 : vector<2x32xf32>
    %167 = arith.addf %165, %166 : vector<2x32xf32>
    %168 = math.tanh %167 : vector<2x32xf32>
    %169 = arith.mulf %163, %168 : vector<2x32xf32>
    %cst_51 = arith.constant dense<0.000000e+00> : vector<2x128xf32>
    %170 = tpu.matmul %169, %3, %cst_51 {dimension_numbers = #tpu.dot_dimension_numbers<[1], [0], [0], [1], [0, 0, 1, 1], [], []>} : vector<2x32xf32>, vector<32x128xf32>, vector<2x128xf32> -> vector<2x128xf32>
    %171 = vector.extract_strided_slice %8 {offsets = [6, 0], sizes = [2, 128], strides = [1, 1]} : vector<16x128xf32> to vector<2x128xf32>
    %172 = arith.addf %171, %143 : vector<2x128xf32>
    %173 = math.tanh %172 : vector<2x128xf32>
    %174 = vector.extract_strided_slice %173 {offsets = [0, 0], sizes = [2, 32], strides = [1, 1]} : vector<2x128xf32> to vector<2x32xf32>
    %cst_52 = arith.constant 5.000000e-01 : f32
    %175 = vector.broadcast %cst_52 : f32 to vector<2x32xf32>
    %176 = arith.mulf %175, %174 : vector<2x32xf32>
    %cst_53 = arith.constant 5.000000e-01 : f32
    %177 = vector.broadcast %cst_53 : f32 to vector<2x32xf32>
    %178 = arith.addf %176, %177 : vector<2x32xf32>
    %179 = vector.extract_strided_slice %173 {offsets = [0, 32], sizes = [2, 32], strides = [1, 1]} : vector<2x128xf32> to vector<2x32xf32>
    %cst_54 = arith.constant 5.000000e-01 : f32
    %180 = vector.broadcast %cst_54 : f32 to vector<2x32xf32>
    %181 = arith.mulf %180, %179 : vector<2x32xf32>
    %cst_55 = arith.constant 5.000000e-01 : f32
    %182 = vector.broadcast %cst_55 : f32 to vector<2x32xf32>
    %183 = arith.addf %181, %182 : vector<2x32xf32>
    %184 = vector.extract_strided_slice %173 {offsets = [0, 64], sizes = [2, 32], strides = [1, 1]} : vector<2x128xf32> to vector<2x32xf32>
    %cst_56 = arith.constant 5.000000e-01 : f32
    %185 = vector.broadcast %cst_56 : f32 to vector<2x32xf32>
    %186 = arith.mulf %185, %184 : vector<2x32xf32>
    %cst_57 = arith.constant 5.000000e-01 : f32
    %187 = vector.broadcast %cst_57 : f32 to vector<2x32xf32>
    %188 = arith.addf %186, %187 : vector<2x32xf32>
    %189 = vector.extract_strided_slice %173 {offsets = [0, 96], sizes = [2, 32], strides = [1, 1]} : vector<2x128xf32> to vector<2x32xf32>
    %190 = arith.mulf %183, %139 : vector<2x32xf32>
    %191 = arith.mulf %178, %189 : vector<2x32xf32>
    %192 = arith.addf %190, %191 : vector<2x32xf32>
    %193 = math.tanh %192 : vector<2x32xf32>
    %194 = arith.mulf %188, %193 : vector<2x32xf32>
    %cst_58 = arith.constant dense<0.000000e+00> : vector<2x256xf32>
    %195 = tpu.matmul %194, %2, %cst_58 {dimension_numbers = #tpu.dot_dimension_numbers<[1], [0], [0], [1], [0, 0, 1, 1], [], []>} : vector<2x32xf32>, vector<32x256xf32>, vector<2x256xf32> -> vector<2x256xf32>
    %196 = vector.extract_strided_slice %195 {offsets = [0, 0], sizes = [2, 128], strides = [1, 1]} : vector<2x256xf32> to vector<2x128xf32>
    %197 = vector.extract_strided_slice %195 {offsets = [0, 128], sizes = [2, 128], strides = [1, 1]} : vector<2x256xf32> to vector<2x128xf32>
    %198 = arith.addf %197, %170 : vector<2x128xf32>
    %199 = vector.broadcast %4 : vector<1x128xf32> to vector<2x128xf32>
    %200 = arith.addf %198, %199 : vector<2x128xf32>
    %201 = math.tanh %200 : vector<2x128xf32>
    %202 = vector.extract_strided_slice %201 {offsets = [0, 0], sizes = [2, 32], strides = [1, 1]} : vector<2x128xf32> to vector<2x32xf32>
    %cst_59 = arith.constant 5.000000e-01 : f32
    %203 = vector.broadcast %cst_59 : f32 to vector<2x32xf32>
    %204 = arith.mulf %203, %202 : vector<2x32xf32>
    %cst_60 = arith.constant 5.000000e-01 : f32
    %205 = vector.broadcast %cst_60 : f32 to vector<2x32xf32>
    %206 = arith.addf %204, %205 : vector<2x32xf32>
    %207 = vector.extract_strided_slice %201 {offsets = [0, 32], sizes = [2, 32], strides = [1, 1]} : vector<2x128xf32> to vector<2x32xf32>
    %cst_61 = arith.constant 5.000000e-01 : f32
    %208 = vector.broadcast %cst_61 : f32 to vector<2x32xf32>
    %209 = arith.mulf %208, %207 : vector<2x32xf32>
    %cst_62 = arith.constant 5.000000e-01 : f32
    %210 = vector.broadcast %cst_62 : f32 to vector<2x32xf32>
    %211 = arith.addf %209, %210 : vector<2x32xf32>
    %212 = vector.extract_strided_slice %201 {offsets = [0, 64], sizes = [2, 32], strides = [1, 1]} : vector<2x128xf32> to vector<2x32xf32>
    %cst_63 = arith.constant 5.000000e-01 : f32
    %213 = vector.broadcast %cst_63 : f32 to vector<2x32xf32>
    %214 = arith.mulf %213, %212 : vector<2x32xf32>
    %cst_64 = arith.constant 5.000000e-01 : f32
    %215 = vector.broadcast %cst_64 : f32 to vector<2x32xf32>
    %216 = arith.addf %214, %215 : vector<2x32xf32>
    %217 = vector.extract_strided_slice %201 {offsets = [0, 96], sizes = [2, 32], strides = [1, 1]} : vector<2x128xf32> to vector<2x32xf32>
    %218 = arith.mulf %211, %167 : vector<2x32xf32>
    %219 = arith.mulf %206, %217 : vector<2x32xf32>
    %220 = arith.addf %218, %219 : vector<2x32xf32>
    %221 = math.tanh %220 : vector<2x32xf32>
    %222 = arith.mulf %216, %221 : vector<2x32xf32>
    %cst_65 = arith.constant dense<0.000000e+00> : vector<2x128xf32>
    %223 = tpu.matmul %222, %3, %cst_65 {dimension_numbers = #tpu.dot_dimension_numbers<[1], [0], [0], [1], [0, 0, 1, 1], [], []>} : vector<2x32xf32>, vector<32x128xf32>, vector<2x128xf32> -> vector<2x128xf32>
    %224 = vector.extract_strided_slice %8 {offsets = [8, 0], sizes = [2, 128], strides = [1, 1]} : vector<16x128xf32> to vector<2x128xf32>
    %225 = arith.addf %224, %196 : vector<2x128xf32>
    %226 = math.tanh %225 : vector<2x128xf32>
    %227 = vector.extract_strided_slice %226 {offsets = [0, 0], sizes = [2, 32], strides = [1, 1]} : vector<2x128xf32> to vector<2x32xf32>
    %cst_66 = arith.constant 5.000000e-01 : f32
    %228 = vector.broadcast %cst_66 : f32 to vector<2x32xf32>
    %229 = arith.mulf %228, %227 : vector<2x32xf32>
    %cst_67 = arith.constant 5.000000e-01 : f32
    %230 = vector.broadcast %cst_67 : f32 to vector<2x32xf32>
    %231 = arith.addf %229, %230 : vector<2x32xf32>
    %232 = vector.extract_strided_slice %226 {offsets = [0, 32], sizes = [2, 32], strides = [1, 1]} : vector<2x128xf32> to vector<2x32xf32>
    %cst_68 = arith.constant 5.000000e-01 : f32
    %233 = vector.broadcast %cst_68 : f32 to vector<2x32xf32>
    %234 = arith.mulf %233, %232 : vector<2x32xf32>
    %cst_69 = arith.constant 5.000000e-01 : f32
    %235 = vector.broadcast %cst_69 : f32 to vector<2x32xf32>
    %236 = arith.addf %234, %235 : vector<2x32xf32>
    %237 = vector.extract_strided_slice %226 {offsets = [0, 64], sizes = [2, 32], strides = [1, 1]} : vector<2x128xf32> to vector<2x32xf32>
    %cst_70 = arith.constant 5.000000e-01 : f32
    %238 = vector.broadcast %cst_70 : f32 to vector<2x32xf32>
    %239 = arith.mulf %238, %237 : vector<2x32xf32>
    %cst_71 = arith.constant 5.000000e-01 : f32
    %240 = vector.broadcast %cst_71 : f32 to vector<2x32xf32>
    %241 = arith.addf %239, %240 : vector<2x32xf32>
    %242 = vector.extract_strided_slice %226 {offsets = [0, 96], sizes = [2, 32], strides = [1, 1]} : vector<2x128xf32> to vector<2x32xf32>
    %243 = arith.mulf %236, %192 : vector<2x32xf32>
    %244 = arith.mulf %231, %242 : vector<2x32xf32>
    %245 = arith.addf %243, %244 : vector<2x32xf32>
    %246 = math.tanh %245 : vector<2x32xf32>
    %247 = arith.mulf %241, %246 : vector<2x32xf32>
    %cst_72 = arith.constant dense<0.000000e+00> : vector<2x256xf32>
    %248 = tpu.matmul %247, %2, %cst_72 {dimension_numbers = #tpu.dot_dimension_numbers<[1], [0], [0], [1], [0, 0, 1, 1], [], []>} : vector<2x32xf32>, vector<32x256xf32>, vector<2x256xf32> -> vector<2x256xf32>
    %249 = vector.extract_strided_slice %248 {offsets = [0, 0], sizes = [2, 128], strides = [1, 1]} : vector<2x256xf32> to vector<2x128xf32>
    %250 = vector.extract_strided_slice %248 {offsets = [0, 128], sizes = [2, 128], strides = [1, 1]} : vector<2x256xf32> to vector<2x128xf32>
    %251 = arith.addf %250, %223 : vector<2x128xf32>
    %252 = vector.broadcast %4 : vector<1x128xf32> to vector<2x128xf32>
    %253 = arith.addf %251, %252 : vector<2x128xf32>
    %254 = math.tanh %253 : vector<2x128xf32>
    %255 = vector.extract_strided_slice %254 {offsets = [0, 0], sizes = [2, 32], strides = [1, 1]} : vector<2x128xf32> to vector<2x32xf32>
    %cst_73 = arith.constant 5.000000e-01 : f32
    %256 = vector.broadcast %cst_73 : f32 to vector<2x32xf32>
    %257 = arith.mulf %256, %255 : vector<2x32xf32>
    %cst_74 = arith.constant 5.000000e-01 : f32
    %258 = vector.broadcast %cst_74 : f32 to vector<2x32xf32>
    %259 = arith.addf %257, %258 : vector<2x32xf32>
    %260 = vector.extract_strided_slice %254 {offsets = [0, 32], sizes = [2, 32], strides = [1, 1]} : vector<2x128xf32> to vector<2x32xf32>
    %cst_75 = arith.constant 5.000000e-01 : f32
    %261 = vector.broadcast %cst_75 : f32 to vector<2x32xf32>
    %262 = arith.mulf %261, %260 : vector<2x32xf32>
    %cst_76 = arith.constant 5.000000e-01 : f32
    %263 = vector.broadcast %cst_76 : f32 to vector<2x32xf32>
    %264 = arith.addf %262, %263 : vector<2x32xf32>
    %265 = vector.extract_strided_slice %254 {offsets = [0, 64], sizes = [2, 32], strides = [1, 1]} : vector<2x128xf32> to vector<2x32xf32>
    %cst_77 = arith.constant 5.000000e-01 : f32
    %266 = vector.broadcast %cst_77 : f32 to vector<2x32xf32>
    %267 = arith.mulf %266, %265 : vector<2x32xf32>
    %cst_78 = arith.constant 5.000000e-01 : f32
    %268 = vector.broadcast %cst_78 : f32 to vector<2x32xf32>
    %269 = arith.addf %267, %268 : vector<2x32xf32>
    %270 = vector.extract_strided_slice %254 {offsets = [0, 96], sizes = [2, 32], strides = [1, 1]} : vector<2x128xf32> to vector<2x32xf32>
    %271 = arith.mulf %264, %220 : vector<2x32xf32>
    %272 = arith.mulf %259, %270 : vector<2x32xf32>
    %273 = arith.addf %271, %272 : vector<2x32xf32>
    %274 = math.tanh %273 : vector<2x32xf32>
    %275 = arith.mulf %269, %274 : vector<2x32xf32>
    %cst_79 = arith.constant dense<0.000000e+00> : vector<2x128xf32>
    %276 = tpu.matmul %275, %3, %cst_79 {dimension_numbers = #tpu.dot_dimension_numbers<[1], [0], [0], [1], [0, 0, 1, 1], [], []>} : vector<2x32xf32>, vector<32x128xf32>, vector<2x128xf32> -> vector<2x128xf32>
    %277 = vector.extract_strided_slice %8 {offsets = [10, 0], sizes = [2, 128], strides = [1, 1]} : vector<16x128xf32> to vector<2x128xf32>
    %278 = arith.addf %277, %249 : vector<2x128xf32>
    %279 = math.tanh %278 : vector<2x128xf32>
    %280 = vector.extract_strided_slice %279 {offsets = [0, 0], sizes = [2, 32], strides = [1, 1]} : vector<2x128xf32> to vector<2x32xf32>
    %cst_80 = arith.constant 5.000000e-01 : f32
    %281 = vector.broadcast %cst_80 : f32 to vector<2x32xf32>
    %282 = arith.mulf %281, %280 : vector<2x32xf32>
    %cst_81 = arith.constant 5.000000e-01 : f32
    %283 = vector.broadcast %cst_81 : f32 to vector<2x32xf32>
    %284 = arith.addf %282, %283 : vector<2x32xf32>
    %285 = vector.extract_strided_slice %279 {offsets = [0, 32], sizes = [2, 32], strides = [1, 1]} : vector<2x128xf32> to vector<2x32xf32>
    %cst_82 = arith.constant 5.000000e-01 : f32
    %286 = vector.broadcast %cst_82 : f32 to vector<2x32xf32>
    %287 = arith.mulf %286, %285 : vector<2x32xf32>
    %cst_83 = arith.constant 5.000000e-01 : f32
    %288 = vector.broadcast %cst_83 : f32 to vector<2x32xf32>
    %289 = arith.addf %287, %288 : vector<2x32xf32>
    %290 = vector.extract_strided_slice %279 {offsets = [0, 64], sizes = [2, 32], strides = [1, 1]} : vector<2x128xf32> to vector<2x32xf32>
    %cst_84 = arith.constant 5.000000e-01 : f32
    %291 = vector.broadcast %cst_84 : f32 to vector<2x32xf32>
    %292 = arith.mulf %291, %290 : vector<2x32xf32>
    %cst_85 = arith.constant 5.000000e-01 : f32
    %293 = vector.broadcast %cst_85 : f32 to vector<2x32xf32>
    %294 = arith.addf %292, %293 : vector<2x32xf32>
    %295 = vector.extract_strided_slice %279 {offsets = [0, 96], sizes = [2, 32], strides = [1, 1]} : vector<2x128xf32> to vector<2x32xf32>
    %296 = arith.mulf %289, %245 : vector<2x32xf32>
    %297 = arith.mulf %284, %295 : vector<2x32xf32>
    %298 = arith.addf %296, %297 : vector<2x32xf32>
    %299 = math.tanh %298 : vector<2x32xf32>
    %300 = arith.mulf %294, %299 : vector<2x32xf32>
    %cst_86 = arith.constant dense<0.000000e+00> : vector<2x256xf32>
    %301 = tpu.matmul %300, %2, %cst_86 {dimension_numbers = #tpu.dot_dimension_numbers<[1], [0], [0], [1], [0, 0, 1, 1], [], []>} : vector<2x32xf32>, vector<32x256xf32>, vector<2x256xf32> -> vector<2x256xf32>
    %302 = vector.extract_strided_slice %301 {offsets = [0, 0], sizes = [2, 128], strides = [1, 1]} : vector<2x256xf32> to vector<2x128xf32>
    %303 = vector.extract_strided_slice %301 {offsets = [0, 128], sizes = [2, 128], strides = [1, 1]} : vector<2x256xf32> to vector<2x128xf32>
    %304 = arith.addf %303, %276 : vector<2x128xf32>
    %305 = vector.broadcast %4 : vector<1x128xf32> to vector<2x128xf32>
    %306 = arith.addf %304, %305 : vector<2x128xf32>
    %307 = math.tanh %306 : vector<2x128xf32>
    %308 = vector.extract_strided_slice %307 {offsets = [0, 0], sizes = [2, 32], strides = [1, 1]} : vector<2x128xf32> to vector<2x32xf32>
    %cst_87 = arith.constant 5.000000e-01 : f32
    %309 = vector.broadcast %cst_87 : f32 to vector<2x32xf32>
    %310 = arith.mulf %309, %308 : vector<2x32xf32>
    %cst_88 = arith.constant 5.000000e-01 : f32
    %311 = vector.broadcast %cst_88 : f32 to vector<2x32xf32>
    %312 = arith.addf %310, %311 : vector<2x32xf32>
    %313 = vector.extract_strided_slice %307 {offsets = [0, 32], sizes = [2, 32], strides = [1, 1]} : vector<2x128xf32> to vector<2x32xf32>
    %cst_89 = arith.constant 5.000000e-01 : f32
    %314 = vector.broadcast %cst_89 : f32 to vector<2x32xf32>
    %315 = arith.mulf %314, %313 : vector<2x32xf32>
    %cst_90 = arith.constant 5.000000e-01 : f32
    %316 = vector.broadcast %cst_90 : f32 to vector<2x32xf32>
    %317 = arith.addf %315, %316 : vector<2x32xf32>
    %318 = vector.extract_strided_slice %307 {offsets = [0, 64], sizes = [2, 32], strides = [1, 1]} : vector<2x128xf32> to vector<2x32xf32>
    %cst_91 = arith.constant 5.000000e-01 : f32
    %319 = vector.broadcast %cst_91 : f32 to vector<2x32xf32>
    %320 = arith.mulf %319, %318 : vector<2x32xf32>
    %cst_92 = arith.constant 5.000000e-01 : f32
    %321 = vector.broadcast %cst_92 : f32 to vector<2x32xf32>
    %322 = arith.addf %320, %321 : vector<2x32xf32>
    %323 = vector.extract_strided_slice %307 {offsets = [0, 96], sizes = [2, 32], strides = [1, 1]} : vector<2x128xf32> to vector<2x32xf32>
    %324 = arith.mulf %317, %273 : vector<2x32xf32>
    %325 = arith.mulf %312, %323 : vector<2x32xf32>
    %326 = arith.addf %324, %325 : vector<2x32xf32>
    %327 = math.tanh %326 : vector<2x32xf32>
    %328 = arith.mulf %322, %327 : vector<2x32xf32>
    %cst_93 = arith.constant dense<0.000000e+00> : vector<2x128xf32>
    %329 = tpu.matmul %328, %3, %cst_93 {dimension_numbers = #tpu.dot_dimension_numbers<[1], [0], [0], [1], [0, 0, 1, 1], [], []>} : vector<2x32xf32>, vector<32x128xf32>, vector<2x128xf32> -> vector<2x128xf32>
    %330 = vector.extract_strided_slice %8 {offsets = [12, 0], sizes = [2, 128], strides = [1, 1]} : vector<16x128xf32> to vector<2x128xf32>
    %331 = arith.addf %330, %302 : vector<2x128xf32>
    %332 = math.tanh %331 : vector<2x128xf32>
    %333 = vector.extract_strided_slice %332 {offsets = [0, 0], sizes = [2, 32], strides = [1, 1]} : vector<2x128xf32> to vector<2x32xf32>
    %cst_94 = arith.constant 5.000000e-01 : f32
    %334 = vector.broadcast %cst_94 : f32 to vector<2x32xf32>
    %335 = arith.mulf %334, %333 : vector<2x32xf32>
    %cst_95 = arith.constant 5.000000e-01 : f32
    %336 = vector.broadcast %cst_95 : f32 to vector<2x32xf32>
    %337 = arith.addf %335, %336 : vector<2x32xf32>
    %338 = vector.extract_strided_slice %332 {offsets = [0, 32], sizes = [2, 32], strides = [1, 1]} : vector<2x128xf32> to vector<2x32xf32>
    %cst_96 = arith.constant 5.000000e-01 : f32
    %339 = vector.broadcast %cst_96 : f32 to vector<2x32xf32>
    %340 = arith.mulf %339, %338 : vector<2x32xf32>
    %cst_97 = arith.constant 5.000000e-01 : f32
    %341 = vector.broadcast %cst_97 : f32 to vector<2x32xf32>
    %342 = arith.addf %340, %341 : vector<2x32xf32>
    %343 = vector.extract_strided_slice %332 {offsets = [0, 64], sizes = [2, 32], strides = [1, 1]} : vector<2x128xf32> to vector<2x32xf32>
    %cst_98 = arith.constant 5.000000e-01 : f32
    %344 = vector.broadcast %cst_98 : f32 to vector<2x32xf32>
    %345 = arith.mulf %344, %343 : vector<2x32xf32>
    %cst_99 = arith.constant 5.000000e-01 : f32
    %346 = vector.broadcast %cst_99 : f32 to vector<2x32xf32>
    %347 = arith.addf %345, %346 : vector<2x32xf32>
    %348 = vector.extract_strided_slice %332 {offsets = [0, 96], sizes = [2, 32], strides = [1, 1]} : vector<2x128xf32> to vector<2x32xf32>
    %349 = arith.mulf %342, %298 : vector<2x32xf32>
    %350 = arith.mulf %337, %348 : vector<2x32xf32>
    %351 = arith.addf %349, %350 : vector<2x32xf32>
    %352 = math.tanh %351 : vector<2x32xf32>
    %353 = arith.mulf %347, %352 : vector<2x32xf32>
    %cst_100 = arith.constant dense<0.000000e+00> : vector<2x256xf32>
    %354 = tpu.matmul %353, %2, %cst_100 {dimension_numbers = #tpu.dot_dimension_numbers<[1], [0], [0], [1], [0, 0, 1, 1], [], []>} : vector<2x32xf32>, vector<32x256xf32>, vector<2x256xf32> -> vector<2x256xf32>
    %355 = vector.extract_strided_slice %354 {offsets = [0, 0], sizes = [2, 128], strides = [1, 1]} : vector<2x256xf32> to vector<2x128xf32>
    %356 = vector.extract_strided_slice %354 {offsets = [0, 128], sizes = [2, 128], strides = [1, 1]} : vector<2x256xf32> to vector<2x128xf32>
    %357 = arith.addf %356, %329 : vector<2x128xf32>
    %358 = vector.broadcast %4 : vector<1x128xf32> to vector<2x128xf32>
    %359 = arith.addf %357, %358 : vector<2x128xf32>
    %360 = math.tanh %359 : vector<2x128xf32>
    %361 = vector.extract_strided_slice %360 {offsets = [0, 0], sizes = [2, 32], strides = [1, 1]} : vector<2x128xf32> to vector<2x32xf32>
    %cst_101 = arith.constant 5.000000e-01 : f32
    %362 = vector.broadcast %cst_101 : f32 to vector<2x32xf32>
    %363 = arith.mulf %362, %361 : vector<2x32xf32>
    %cst_102 = arith.constant 5.000000e-01 : f32
    %364 = vector.broadcast %cst_102 : f32 to vector<2x32xf32>
    %365 = arith.addf %363, %364 : vector<2x32xf32>
    %366 = vector.extract_strided_slice %360 {offsets = [0, 32], sizes = [2, 32], strides = [1, 1]} : vector<2x128xf32> to vector<2x32xf32>
    %cst_103 = arith.constant 5.000000e-01 : f32
    %367 = vector.broadcast %cst_103 : f32 to vector<2x32xf32>
    %368 = arith.mulf %367, %366 : vector<2x32xf32>
    %cst_104 = arith.constant 5.000000e-01 : f32
    %369 = vector.broadcast %cst_104 : f32 to vector<2x32xf32>
    %370 = arith.addf %368, %369 : vector<2x32xf32>
    %371 = vector.extract_strided_slice %360 {offsets = [0, 64], sizes = [2, 32], strides = [1, 1]} : vector<2x128xf32> to vector<2x32xf32>
    %cst_105 = arith.constant 5.000000e-01 : f32
    %372 = vector.broadcast %cst_105 : f32 to vector<2x32xf32>
    %373 = arith.mulf %372, %371 : vector<2x32xf32>
    %cst_106 = arith.constant 5.000000e-01 : f32
    %374 = vector.broadcast %cst_106 : f32 to vector<2x32xf32>
    %375 = arith.addf %373, %374 : vector<2x32xf32>
    %376 = vector.extract_strided_slice %360 {offsets = [0, 96], sizes = [2, 32], strides = [1, 1]} : vector<2x128xf32> to vector<2x32xf32>
    %377 = arith.mulf %370, %326 : vector<2x32xf32>
    %378 = arith.mulf %365, %376 : vector<2x32xf32>
    %379 = arith.addf %377, %378 : vector<2x32xf32>
    %380 = math.tanh %379 : vector<2x32xf32>
    %381 = arith.mulf %375, %380 : vector<2x32xf32>
    %cst_107 = arith.constant dense<0.000000e+00> : vector<2x128xf32>
    %382 = tpu.matmul %381, %3, %cst_107 {dimension_numbers = #tpu.dot_dimension_numbers<[1], [0], [0], [1], [0, 0, 1, 1], [], []>} : vector<2x32xf32>, vector<32x128xf32>, vector<2x128xf32> -> vector<2x128xf32>
    %383 = vector.extract_strided_slice %8 {offsets = [14, 0], sizes = [2, 128], strides = [1, 1]} : vector<16x128xf32> to vector<2x128xf32>
    %384 = arith.addf %383, %355 : vector<2x128xf32>
    %385 = math.tanh %384 : vector<2x128xf32>
    %386 = vector.extract_strided_slice %385 {offsets = [0, 0], sizes = [2, 32], strides = [1, 1]} : vector<2x128xf32> to vector<2x32xf32>
    %cst_108 = arith.constant 5.000000e-01 : f32
    %387 = vector.broadcast %cst_108 : f32 to vector<2x32xf32>
    %388 = arith.mulf %387, %386 : vector<2x32xf32>
    %cst_109 = arith.constant 5.000000e-01 : f32
    %389 = vector.broadcast %cst_109 : f32 to vector<2x32xf32>
    %390 = arith.addf %388, %389 : vector<2x32xf32>
    %391 = vector.extract_strided_slice %385 {offsets = [0, 32], sizes = [2, 32], strides = [1, 1]} : vector<2x128xf32> to vector<2x32xf32>
    %cst_110 = arith.constant 5.000000e-01 : f32
    %392 = vector.broadcast %cst_110 : f32 to vector<2x32xf32>
    %393 = arith.mulf %392, %391 : vector<2x32xf32>
    %cst_111 = arith.constant 5.000000e-01 : f32
    %394 = vector.broadcast %cst_111 : f32 to vector<2x32xf32>
    %395 = arith.addf %393, %394 : vector<2x32xf32>
    %396 = vector.extract_strided_slice %385 {offsets = [0, 64], sizes = [2, 32], strides = [1, 1]} : vector<2x128xf32> to vector<2x32xf32>
    %cst_112 = arith.constant 5.000000e-01 : f32
    %397 = vector.broadcast %cst_112 : f32 to vector<2x32xf32>
    %398 = arith.mulf %397, %396 : vector<2x32xf32>
    %cst_113 = arith.constant 5.000000e-01 : f32
    %399 = vector.broadcast %cst_113 : f32 to vector<2x32xf32>
    %400 = arith.addf %398, %399 : vector<2x32xf32>
    %401 = vector.extract_strided_slice %385 {offsets = [0, 96], sizes = [2, 32], strides = [1, 1]} : vector<2x128xf32> to vector<2x32xf32>
    %402 = arith.mulf %395, %351 : vector<2x32xf32>
    %403 = arith.mulf %390, %401 : vector<2x32xf32>
    %404 = arith.addf %402, %403 : vector<2x32xf32>
    %405 = math.tanh %404 : vector<2x32xf32>
    %406 = arith.mulf %400, %405 : vector<2x32xf32>
    %cst_114 = arith.constant dense<0.000000e+00> : vector<2x256xf32>
    %407 = tpu.matmul %406, %2, %cst_114 {dimension_numbers = #tpu.dot_dimension_numbers<[1], [0], [0], [1], [0, 0, 1, 1], [], []>} : vector<2x32xf32>, vector<32x256xf32>, vector<2x256xf32> -> vector<2x256xf32>
    %408 = vector.extract_strided_slice %407 {offsets = [0, 128], sizes = [2, 128], strides = [1, 1]} : vector<2x256xf32> to vector<2x128xf32>
    %409 = arith.addf %408, %382 : vector<2x128xf32>
    %410 = vector.broadcast %4 : vector<1x128xf32> to vector<2x128xf32>
    %411 = arith.addf %409, %410 : vector<2x128xf32>
    %412 = math.tanh %411 : vector<2x128xf32>
    %413 = vector.extract_strided_slice %412 {offsets = [0, 0], sizes = [2, 32], strides = [1, 1]} : vector<2x128xf32> to vector<2x32xf32>
    %cst_115 = arith.constant 5.000000e-01 : f32
    %414 = vector.broadcast %cst_115 : f32 to vector<2x32xf32>
    %415 = arith.mulf %414, %413 : vector<2x32xf32>
    %cst_116 = arith.constant 5.000000e-01 : f32
    %416 = vector.broadcast %cst_116 : f32 to vector<2x32xf32>
    %417 = arith.addf %415, %416 : vector<2x32xf32>
    %418 = vector.extract_strided_slice %412 {offsets = [0, 32], sizes = [2, 32], strides = [1, 1]} : vector<2x128xf32> to vector<2x32xf32>
    %cst_117 = arith.constant 5.000000e-01 : f32
    %419 = vector.broadcast %cst_117 : f32 to vector<2x32xf32>
    %420 = arith.mulf %419, %418 : vector<2x32xf32>
    %cst_118 = arith.constant 5.000000e-01 : f32
    %421 = vector.broadcast %cst_118 : f32 to vector<2x32xf32>
    %422 = arith.addf %420, %421 : vector<2x32xf32>
    %423 = vector.extract_strided_slice %412 {offsets = [0, 64], sizes = [2, 32], strides = [1, 1]} : vector<2x128xf32> to vector<2x32xf32>
    %cst_119 = arith.constant 5.000000e-01 : f32
    %424 = vector.broadcast %cst_119 : f32 to vector<2x32xf32>
    %425 = arith.mulf %424, %423 : vector<2x32xf32>
    %cst_120 = arith.constant 5.000000e-01 : f32
    %426 = vector.broadcast %cst_120 : f32 to vector<2x32xf32>
    %427 = arith.addf %425, %426 : vector<2x32xf32>
    %428 = vector.extract_strided_slice %412 {offsets = [0, 96], sizes = [2, 32], strides = [1, 1]} : vector<2x128xf32> to vector<2x32xf32>
    %429 = arith.mulf %422, %379 : vector<2x32xf32>
    %430 = arith.mulf %417, %428 : vector<2x32xf32>
    %431 = arith.addf %429, %430 : vector<2x32xf32>
    %432 = math.tanh %431 : vector<2x32xf32>
    %433 = arith.mulf %427, %432 : vector<2x32xf32>
    %cst_121 = arith.constant dense<0.000000e+00> : vector<2xf32>
    %434 = vector.multi_reduction <add>, %433, %cst_121 [1] : vector<2x32xf32> to vector<2xf32>
    %435 = vector.shape_cast %434 : vector<2xf32> to vector<2x1xf32>
    %cst_122 = arith.constant 3.200000e+01 : f32
    %436 = vector.broadcast %cst_122 : f32 to vector<2x1xf32>
    %437 = arith.divf %435, %436 : vector<2x1xf32>
    %438 = vector.broadcast %437 : vector<2x1xf32> to vector<2x32xf32>
    %439 = arith.subf %433, %438 : vector<2x32xf32>
    %440 = arith.mulf %439, %439 : vector<2x32xf32>
    %cst_123 = arith.constant dense<0.000000e+00> : vector<2xf32>
    %441 = vector.multi_reduction <add>, %440, %cst_123 [1] : vector<2x32xf32> to vector<2xf32>
    %442 = vector.shape_cast %441 : vector<2xf32> to vector<2x1xf32>
    %cst_124 = arith.constant 3.200000e+01 : f32
    %443 = vector.broadcast %cst_124 : f32 to vector<2x1xf32>
    %444 = arith.divf %442, %443 : vector<2x1xf32>
    %445 = vector.broadcast %437 : vector<2x1xf32> to vector<2x32xf32>
    %446 = arith.subf %433, %445 : vector<2x32xf32>
    %cst_125 = arith.constant 9.99999974E-6 : f32
    %447 = vector.broadcast %cst_125 : f32 to vector<2x1xf32>
    %448 = arith.addf %444, %447 : vector<2x1xf32>
    %449 = math.rsqrt %448 : vector<2x1xf32>
    %450 = vector.broadcast %449 : vector<2x1xf32> to vector<2x32xf32>
    %451 = arith.mulf %446, %450 : vector<2x32xf32>
    %c88 = arith.constant 88 : index
    %c0_126 = arith.constant 0 : index
    %452 = vector.load %arg1[%c88, %c0_126] : memref<256x256xf32, #tpu.memory_space<vmem>>, vector<1x32xf32>
    %453 = vector.broadcast %452 : vector<1x32xf32> to vector<2x32xf32>
    %454 = arith.mulf %451, %453 : vector<2x32xf32>
    %c96 = arith.constant 96 : index
    %c0_127 = arith.constant 0 : index
    %455 = vector.load %arg1[%c96, %c0_127] : memref<256x256xf32, #tpu.memory_space<vmem>>, vector<1x32xf32>
    %456 = vector.broadcast %455 : vector<1x32xf32> to vector<2x32xf32>
    %457 = arith.addf %454, %456 : vector<2x32xf32>
    %c104 = arith.constant 104 : index
    %c0_128 = arith.constant 0 : index
    %458 = vector.load %arg1[%c104, %c0_128] : memref<256x256xf32, #tpu.memory_space<vmem>>, vector<32x64xf32>
    %cst_129 = arith.constant dense<0.000000e+00> : vector<2x64xf32>
    %459 = tpu.matmul %457, %458, %cst_129 {dimension_numbers = #tpu.dot_dimension_numbers<[1], [0], [0], [1], [0, 0, 1, 1], [], []>} : vector<2x32xf32>, vector<32x64xf32>, vector<2x64xf32> -> vector<2x64xf32>
    %c136 = arith.constant 136 : index
    %c0_130 = arith.constant 0 : index
    %460 = vector.load %arg1[%c136, %c0_130] : memref<256x256xf32, #tpu.memory_space<vmem>>, vector<1x64xf32>
    %461 = vector.broadcast %460 : vector<1x64xf32> to vector<2x64xf32>
    %462 = arith.addf %459, %461 : vector<2x64xf32>
    %cst_131 = arith.constant 0.000000e+00 : f32
    %463 = vector.broadcast %cst_131 : f32 to vector<2x64xf32>
    %464 = arith.maximumf %462, %463 : vector<2x64xf32>
    %c144 = arith.constant 144 : index
    %c0_132 = arith.constant 0 : index
    %465 = vector.load %arg1[%c144, %c0_132] : memref<256x256xf32, #tpu.memory_space<vmem>>, vector<64x32xf32>
    %cst_133 = arith.constant dense<0.000000e+00> : vector<2x32xf32>
    %466 = tpu.matmul %464, %465, %cst_133 {dimension_numbers = #tpu.dot_dimension_numbers<[1], [0], [0], [1], [0, 0, 1, 1], [], []>} : vector<2x64xf32>, vector<64x32xf32>, vector<2x32xf32> -> vector<2x32xf32>
    %c208 = arith.constant 208 : index
    %c0_134 = arith.constant 0 : index
    %467 = vector.load %arg1[%c208, %c0_134] : memref<256x256xf32, #tpu.memory_space<vmem>>, vector<1x32xf32>
    %468 = vector.broadcast %467 : vector<1x32xf32> to vector<2x32xf32>
    %469 = arith.addf %466, %468 : vector<2x32xf32>
    %cst_135 = arith.constant 0.000000e+00 : f32
    %470 = vector.broadcast %cst_135 : f32 to vector<2x32xf32>
    %471 = arith.maximumf %469, %470 : vector<2x32xf32>
    %c216 = arith.constant 216 : index
    %c0_136 = arith.constant 0 : index
    %472 = vector.load %arg1[%c216, %c0_136] : memref<256x256xf32, #tpu.memory_space<vmem>>, vector<32x4xf32>
    %cst_137 = arith.constant dense<0.000000e+00> : vector<2x4xf32>
    %473 = tpu.matmul %471, %472, %cst_137 {dimension_numbers = #tpu.dot_dimension_numbers<[1], [0], [0], [1], [0, 0, 1, 1], [], []>} : vector<2x32xf32>, vector<32x4xf32>, vector<2x4xf32> -> vector<2x4xf32>
    %c248 = arith.constant 248 : index
    %c0_138 = arith.constant 0 : index
    %474 = vector.load %arg1[%c248, %c0_138] : memref<256x256xf32, #tpu.memory_space<vmem>>, vector<1x4xf32>
    %475 = vector.broadcast %474 : vector<1x4xf32> to vector<2x4xf32>
    %476 = arith.addf %473, %475 : vector<2x4xf32>
    %c0_139 = arith.constant 0 : index
    %c0_140 = arith.constant 0 : index
    %477 = vector.load %arg2[%c0_139, %c0_140] : memref<2x4xf32, #tpu.memory_space<vmem>>, vector<2x4xf32>
    tpu.vector_store %arg2[%c0_139, %c0_140], %476 {strides = array<i32>} : memref<2x4xf32, #tpu.memory_space<vmem>>, vector<2x4xf32>,
    return
  }
}

</mosaic_0001>

<llo_original>
// kernel: lstm2_forecast.1
$region0: #{lstm2_forecast.1}
  #allocation0 [shape = 'u32[]', space=smem, size = 0x4, offset = 0x4, fixed_abs, tag = 'smem constant byte address 0x4 - core index']
  #allocation1 [shape = 'u32[144,128]{1,0:T(1,128)}', space=vmem, size = 0x12000, scoped, tag = 'internal scratch']
  %s0 = inlined_call_operand.vmem [shape: f32[16,4], index: 0, kind: input, shape index: {}]
  %s1 = inlined_call_operand.hbm [shape: f32[256,256], index: 1, kind: input, shape index: {}]
  %s2 = inlined_call_operand.hbm [shape: f32[2,4], index: 2, kind: output, shape index: {}]
  %s3 = sld [smem:[#allocation0]]
  $region22: #{lstm2_forecast.1} parent=0
    _
  %s5 = ssub.s32 1, %s3
  %s6 = scalar_select 0, %s5, %s3
  $region1: #{lstm2_forecast.1} parent=0
    #allocation2 [shape = 'u8[262144]{0}', space=vmem, size = 0x40000, scoped, tag = 'input window, operand 1, single buffered']
    #allocation3 [shape = 's32[1]{0}', space=sflag, size = 0x4, scoped, tag = 'scoped memory for lstm2_forecast.1']
    #allocation4 [shape = 's32[1]{0}', space=sflag, size = 0x4, scoped, tag = 'scoped memory for lstm2_forecast.1']
    #allocation5 [shape = 'u8[1024]{0}', space=vmem, size = 0x400, scoped, tag = 'output window, operand 0, single buffered']
    %7 = vsyncpa [#allocation3], 0
    %8 = vsyncpa [#allocation4], 0
    // Predicated region
    $region2: #{lstm2_forecast.1} parent=1 // pred_check
      _
    $region3: #{lstm2_forecast.1} parent=1 // pred_check_branch
      %10 = sbr.rel (0) target = $region5
    $region4: #{lstm2_forecast.1} parent=1 // pred_region
      _
    $region5: #{lstm2_forecast.1} parent=1 // pred_fallthru
      _
    // Predicated region
    $region6: #{lstm2_forecast.1} parent=1 // pred_check
      _
    $region7: #{lstm2_forecast.1} parent=1 // pred_check_branch
      %12 = sbr.rel (0) target = $region9
    $region8: #{lstm2_forecast.1} parent=1 // pred_region
      %s14 = ssub.s32 8192, 8192
      %15 = vsyncadd [#allocation3], %s14
      %s16 = sshll.u32 [#allocation2], 4
      %s17 = int_to_ptr.vmem [resolvable:$true] %s16
      %22 = dma.hbm_to_vmem [thread:$0]  %s1, 8192, %s17, [#allocation3], 256, 256, 16
    $region9: #{lstm2_forecast.1} parent=1 // pred_fallthru
      _
    // Predicated region
    $region10: #{lstm2_forecast.1} parent=1 // pred_check
      _
    $region11: #{lstm2_forecast.1} parent=1 // pred_check_branch
      %24 = sbr.rel (0) target = $region13
    $region12: #{lstm2_forecast.1} parent=1 // pred_region
      %25 = dma.done [#allocation3], 8192
    $region13: #{lstm2_forecast.1} parent=1 // pred_fallthru
      _
    %v26 = vld [vmem:[#allocation2] sm:$0xf]
    %v27 = vld [vmem:[#allocation2 + $0x10] ss:$0 sm:$0xff]
    %v28 = vld [vmem:[#allocation2 + $0x20] sm:$0xff]
    %v29 = vld [vmem:[#allocation2 + $0x28] sm:$0xff]
    %v30 = vld [vmem:[#allocation2 + $0x30] sm:$0xff]
    %v31 = vld [vmem:[#allocation2 + $0x38] sm:$0xff]
    %v32 = vld [vmem:[#allocation2 + $0x40] sm:$0xff]
    %v33 = vld [vmem:[#allocation2 + $0x48] sm:$0xff]
    %v34 = vld [vmem:[#allocation2 + $0x50] sm:$0xff]
    %v35 = vld [vmem:[#allocation2 + $0x58] sm:$0xff]
    %v36 = vld [vmem:[#allocation2 + $0x60] sm:$0xff]
    %v37 = vld [vmem:[#allocation2 + $0x70] sm:$0xff]
    %v38 = vld [vmem:[#allocation2 + $0x80] sm:$0xff]
    %v39 = vld [vmem:[#allocation2 + $0x90] sm:$0xff]
    %v40 = vld [vmem:[#allocation2 + $0xa0] ss:$0 sm:$0xff]
    %v41 = vld [vmem:[%s0] sm:$0xff]
    %v42 = vld [vmem:[%s0 + $0x8] sm:$0xff]
    %vm43 = vcmask 31744
    %v45 = vsel %vm43, %v41, 0
    %v48 = vsel %vm43, %v42, 0
    %vm50 = vcmask 1043456
    %v52 = vsel %vm50, %v26, 0
    %54 = vmatprep.subr.mxu0 0.0
    %55 = vmatpush1.msra.mxu0 %v52
    %56 = vmatprep.subr.mxu0 0.0
    %57 = vmatpush1.msra.mxu0 0.0
    %58 = vmatprep.subr.mxu0 0.0
    %59 = vmatpush1.msra.mxu0 0.0
    %60 = vmatprep.subr.mxu0 0.0
    %61 = vmatpush1.msra.mxu0 0.0
    %62 = vmatprep.subr.mxu0 0.0
    %63 = vmatpush1.msra.mxu0 0.0
    %64 = vmatprep.subr.mxu0 0.0
    %65 = vmatpush1.msra.mxu0 0.0
    %66 = vmatprep.subr.mxu0 0.0
    %67 = vmatpush1.msra.mxu0 0.0
    %68 = vmatprep.subr.mxu0 0.0
    %69 = vmatpush1.msra.mxu0 0.0
    %70 = vmatprep.subr.mxu0 0.0
    %71 = vmatpush1.msra.mxu0 0.0
    %72 = vmatprep.subr.mxu0 0.0
    %73 = vmatpush1.msra.mxu0 0.0
    %74 = vmatprep.subr.mxu0 0.0
    %75 = vmatpush1.msra.mxu0 0.0
    %76 = vmatprep.subr.mxu0 0.0
    %77 = vmatpush1.msra.mxu0 0.0
    %78 = vmatprep.subr.mxu0 0.0
    %79 = vmatpush1.msra.mxu0 0.0
    %80 = vmatprep.subr.mxu0 0.0
    %81 = vmatpush1.msra.mxu0 0.0
    %82 = vmatprep.subr.mxu0 0.0
    %83 = vmatpush1.msra.mxu0 0.0
    %84 = vmatprep.subr.mxu0 0.0
    %85 = vmatpush1.msra.mxu0 0.0
    %86 = vmatprep.subr.mxu0 0.0
    %87 = vmatpush1.msra.mxu0 0.0
    %88 = vmatprep.subr.mxu0 0.0
    %89 = vmatpush1.msra.mxu0 0.0
    %90 = vmatprep.subr.mxu0 0.0
    %91 = vmatpush1.msra.mxu0 0.0
    %92 = vmatprep.subr.mxu0 0.0
    %93 = vmatpush1.msra.mxu0 0.0
    %94 = vmatprep.subr.mxu0 0.0
    %95 = vmatpush1.msra.mxu0 0.0
    %96 = vmatprep.subr.mxu0 0.0
    %97 = vmatpush1.msra.mxu0 0.0
    %98 = vmatprep.subr.mxu0 0.0
    %99 = vmatpush1.msra.mxu0 0.0
    %100 = vmatprep.subr.mxu0 0.0
    %101 = vmatpush1.msra.mxu0 0.0
    %102 = vmatprep.subr.mxu0 0.0
    %103 = vmatpush1.msra.mxu0 0.0
    %104 = vmatprep.subr.mxu0 0.0
    %105 = vmatpush1.msra.mxu0 0.0
    %106 = vmatprep.subr.mxu0 0.0
    %107 = vmatpush1.msra.mxu0 0.0
    %108 = vmatprep.subr.mxu0 0.0
    %109 = vmatpush1.msra.mxu0 0.0
    %110 = vmatprep.subr.mxu0 0.0
    %111 = vmatpush1.msra.mxu0 0.0
    %112 = vmatprep.subr.mxu0 0.0
    %113 = vmatpush1.msra.mxu0 0.0
    %114 = vmatprep.subr.mxu0 0.0
    %115 = vmatpush1.msra.mxu0 0.0
    %116 = vmatprep.subr.mxu0 0.0
    %117 = vmatpush1.msra.mxu0 0.0
    %118 = vmatprep.mubr.f32.mxu0 0.0
    %119 = vmatmul.mubr.f32.gmra.mrb[0].mxu0 %v45
    %v120 = vpop.f32.mrb[0].mxu0
    %v121 = vadd.f32 %v27, %v120
    %v122 = vpop.f32.mrb[0].mxu0
    %123 = vmatprep.mubr.f32.mxu0 0.0
    %124 = vmatmul.mubr.f32.gmra.mrb[0].mxu0 %v48
    %v125 = vpop.f32.mrb[0].mxu0
    %v126 = vadd.f32 %v27, %v125
    %v127 = vpop.f32.mrb[0].mxu0
    %128 = vdwg.mxu0
    %vm129 = vcmask 261120
    %v131 = vsel %vm129, 0.0, 0
    %133 = vmatprep.subr.mxu0 0.0
    %134 = vmatpush1.msra.mxu0 %v36
    %135 = vmatprep.subr.mxu0 0.0
    %136 = vmatpush1.msra.mxu0 %v37
    %137 = vmatprep.subr.mxu0 0.0
    %138 = vmatpush1.msra.mxu0 %v38
    %139 = vmatprep.subr.mxu0 0.0
    %140 = vmatpush1.msra.mxu0 %v39
    %141 = vmatprep.subr.mxu0 0.0
    %142 = vmatpush1.msra.mxu0 0.0
    %143 = vmatprep.subr.mxu0 0.0
    %144 = vmatpush1.msra.mxu0 0.0
    %145 = vmatprep.subr.mxu0 0.0
    %146 = vmatpush1.msra.mxu0 0.0
    %147 = vmatprep.subr.mxu0 0.0
    %148 = vmatpush1.msra.mxu0 0.0
    %149 = vmatprep.subr.mxu0 0.0
    %150 = vmatpush1.msra.mxu0 0.0
    %151 = vmatprep.subr.mxu0 0.0
    %152 = vmatpush1.msra.mxu0 0.0
    %153 = vmatprep.subr.mxu0 0.0
    %154 = vmatpush1.msra.mxu0 0.0
    %155 = vmatprep.subr.mxu0 0.0
    %156 = vmatpush1.msra.mxu0 0.0
    %157 = vmatprep.subr.mxu0 0.0
    %158 = vmatpush1.msra.mxu0 0.0
    %159 = vmatprep.subr.mxu0 0.0
    %160 = vmatpush1.msra.mxu0 0.0
    %161 = vmatprep.subr.mxu0 0.0
    %162 = vmatpush1.msra.mxu0 0.0
    %163 = vmatprep.subr.mxu0 0.0
    %164 = vmatpush1.msra.mxu0 0.0
    %165 = vmatprep.subr.mxu0 0.0
    %166 = vmatpush1.msra.mxu0 0.0
    %167 = vmatprep.subr.mxu0 0.0
    %168 = vmatpush1.msra.mxu0 0.0
    %169 = vmatprep.subr.mxu0 0.0
    %170 = vmatpush1.msra.mxu0 0.0
    %171 = vmatprep.subr.mxu0 0.0
    %172 = vmatpush1.msra.mxu0 0.0
    %173 = vmatprep.subr.mxu0 0.0
    %174 = vmatpush1.msra.mxu0 0.0
    %175 = vmatprep.subr.mxu0 0.0
    %176 = vmatpush1.msra.mxu0 0.0
    %177 = vmatprep.subr.mxu0 0.0
    %178 = vmatpush1.msra.mxu0 0.0
    %179 = vmatprep.subr.mxu0 0.0
    %180 = vmatpush1.msra.mxu0 0.0
    %181 = vmatprep.subr.mxu0 0.0
    %182 = vmatpush1.msra.mxu0 0.0
    %183 = vmatprep.subr.mxu0 0.0
    %184 = vmatpush1.msra.mxu0 0.0
    %185 = vmatprep.subr.mxu0 0.0
    %186 = vmatpush1.msra.mxu0 0.0
    %187 = vmatprep.subr.mxu0 0.0
    %188 = vmatpush1.msra.mxu0 0.0
    %189 = vmatprep.subr.mxu0 0.0
    %190 = vmatpush1.msra.mxu0 0.0
    %191 = vmatprep.subr.mxu0 0.0
    %192 = vmatpush1.msra.mxu0 0.0
    %193 = vmatprep.subr.mxu0 0.0
    %194 = vmatpush1.msra.mxu0 0.0
    %195 = vmatprep.subr.mxu0 0.0
    %196 = vmatpush1.msra.mxu0 0.0
    %197 = vmatprep.mubr.f32.mxu0 0.0
    %198 = vmatmul.mubr.f32.gmra.mrb[0].mxu0 %v131
    %v199 = vpop.f32.mrb[0].mxu0
    %v200 = vadd.f32 0.0, %v199
    %v201 = vpop.f32.mrb[0].mxu0
    %202 = vdwg.mxu0
    %v203 = vadd.f32 %v121, 0.0
    %v204 = vtanh.pop %v203
    %v205 = vmul.f32 %v204, 0.5
    %v206 = vadd.f32 %v205, 0.5
    %v207 = vmul.f32 %v206, 0.0
    %209 = vrot.lane.b32.xlu0 %v204, 32
    %v210 = vpop.permute.xlu0 %209
    %v212 = vmul.f32 %v206, %v210
    %214 = vrot.lane.b32.xlu0 %v212, 32
    %v215 = vpop.permute.xlu0 %214
    %v217 = vadd.f32 %v207, %v215
    %v218 = vtanh.pop %v217
    %220 = vrot.lane.b32.xlu0 %v218, 32
    %v221 = vpop.permute.xlu0 %220
    %v223 = vmul.f32 %v206, %v221
    %225 = vrot.lane.b32.xlu0 %v223, 64
    %v226 = vpop.permute.xlu0 %225
    %v227 = vsel %vm129, %v226, 0
    %229 = vmatprep.subr.mxu0 %v29
    %230 = vmatpush1.msra.mxu0 %v28
    %231 = vmatprep.subr.mxu0 %v31
    %232 = vmatpush1.msra.mxu0 %v30
    %233 = vmatprep.subr.mxu0 %v33
    %234 = vmatpush1.msra.mxu0 %v32
    %235 = vmatprep.subr.mxu0 %v35
    %236 = vmatpush1.msra.mxu0 %v34
    %237 = vmatprep.subr.mxu0 0.0
    %238 = vmatpush1.msra.mxu0 0.0
    %239 = vmatprep.subr.mxu0 0.0
    %240 = vmatpush1.msra.mxu0 0.0
    %241 = vmatprep.subr.mxu0 0.0
    %242 = vmatpush1.msra.mxu0 0.0
    %243 = vmatprep.subr.mxu0 0.0
    %244 = vmatpush1.msra.mxu0 0.0
    %245 = vmatprep.subr.mxu0 0.0
    %246 = vmatpush1.msra.mxu0 0.0
    %247 = vmatprep.subr.mxu0 0.0
    %248 = vmatpush1.msra.mxu0 0.0
    %249 = vmatprep.subr.mxu0 0.0
    %250 = vmatpush1.msra.mxu0 0.0
    %251 = vmatprep.subr.mxu0 0.0
    %252 = vmatpush1.msra.mxu0 0.0
    %253 = vmatprep.subr.mxu0 0.0
    %254 = vmatpush1.msra.mxu0 0.0
    %255 = vmatprep.subr.mxu0 0.0
    %256 = vmatpush1.msra.mxu0 0.0
    %257 = vmatprep.subr.mxu0 0.0
    %258 = vmatpush1.msra.mxu0 0.0
    %259 = vmatprep.subr.mxu0 0.0
    %260 = vmatpush1.msra.mxu0 0.0
    %261 = vmatprep.subr.mxu0 0.0
    %262 = vmatpush1.msra.mxu0 0.0
    %263 = vmatprep.subr.mxu0 0.0
    %264 = vmatpush1.msra.mxu0 0.0
    %265 = vmatprep.subr.mxu0 0.0
    %266 = vmatpush1.msra.mxu0 0.0
    %267 = vmatprep.subr.mxu0 0.0
    %268 = vmatpush1.msra.mxu0 0.0
    %269 = vmatprep.subr.mxu0 0.0
    %270 = vmatpush1.msra.mxu0 0.0
    %271 = vmatprep.subr.mxu0 0.0
    %272 = vmatpush1.msra.mxu0 0.0
    %273 = vmatprep.subr.mxu0 0.0
    %274 = vmatpush1.msra.mxu0 0.0
    %275 = vmatprep.subr.mxu0 0.0
    %276 = vmatpush1.msra.mxu0 0.0
    %277 = vmatprep.subr.mxu0 0.0
    %278 = vmatpush1.msra.mxu0 0.0
    %279 = vmatprep.subr.mxu0 0.0
    %280 = vmatpush1.msra.mxu0 0.0
    %281 = vmatprep.subr.mxu0 0.0
    %282 = vmatpush1.msra.mxu0 0.0
    %283 = vmatprep.subr.mxu0 0.0
    %284 = vmatpush1.msra.mxu0 0.0
    %285 = vmatprep.subr.mxu0 0.0
    %286 = vmatpush1.msra.mxu0 0.0
    %287 = vmatprep.subr.mxu0 0.0
    %288 = vmatpush1.msra.mxu0 0.0
    %289 = vmatprep.subr.mxu0 0.0
    %290 = vmatpush1.msra.mxu0 0.0
    %291 = vmatprep.subr.mxu0 0.0
    %292 = vmatpush1.msra.mxu0 0.0
    %293 = vmatprep.mubr.f32.mxu0 0.0
    %294 = vmatmul.mubr.f32.gmra.mrb[0].mxu0 %v227
    %v295 = vpop.f32.mrb[0].mxu0
    %v296 = vadd.f32 0.0, %v295
    %v297 = vpop.f32.mrb[0].mxu0
    %v298 = vadd.f32 0.0, %v297
    %299 = vdwg.mxu0
    %v300 = vadd.f32 %v298, %v200
    %v301 = vadd.f32 %v300, %v40
    %v302 = vtanh.pop %v301
    %v303 = vmul.f32 %v302, 0.5
    %v304 = vadd.f32 %v303, 0.5
    %v305 = vmul.f32 %v304, 0.0
    %307 = vrot.lane.b32.xlu0 %v302, 32
    %v308 = vpop.permute.xlu0 %307
    %v310 = vmul.f32 %v304, %v308
    %312 = vrot.lane.b32.xlu0 %v310, 32
    %v313 = vpop.permute.xlu0 %312
    %v315 = vadd.f32 %v305, %v313
    %v316 = vtanh.pop %v315
    %318 = vrot.lane.b32.xlu0 %v316, 32
    %v319 = vpop.permute.xlu0 %318
    %v321 = vmul.f32 %v304, %v319
    %323 = vrot.lane.b32.xlu0 %v321, 64
    %v324 = vpop.permute.xlu0 %323
    %v325 = vsel %vm129, %v324, 0
    %327 = vmatprep.subr.mxu0 0.0
    %328 = vmatpush1.msra.mxu0 %v36
    %329 = vmatprep.subr.mxu0 0.0
    %330 = vmatpush1.msra.mxu0 %v37
    %331 = vmatprep.subr.mxu0 0.0
    %332 = vmatpush1.msra.mxu0 %v38
    %333 = vmatprep.subr.mxu0 0.0
    %334 = vmatpush1.msra.mxu0 %v39
    %335 = vmatprep.subr.mxu0 0.0
    %336 = vmatpush1.msra.mxu0 0.0
    %337 = vmatprep.subr.mxu0 0.0
    %338 = vmatpush1.msra.mxu0 0.0
    %339 = vmatprep.subr.mxu0 0.0
    %340 = vmatpush1.msra.mxu0 0.0
    %341 = vmatprep.subr.mxu0 0.0
    %342 = vmatpush1.msra.mxu0 0.0
    %343 = vmatprep.subr.mxu0 0.0
    %344 = vmatpush1.msra.mxu0 0.0
    %345 = vmatprep.subr.mxu0 0.0
    %346 = vmatpush1.msra.mxu0 0.0
    %347 = vmatprep.subr.mxu0 0.0
    %348 = vmatpush1.msra.mxu0 0.0
    %349 = vmatprep.subr.mxu0 0.0
    %350 = vmatpush1.msra.mxu0 0.0
    %351 = vmatprep.subr.mxu0 0.0
    %352 = vmatpush1.msra.mxu0 0.0
    %353 = vmatprep.subr.mxu0 0.0
    %354 = vmatpush1.msra.mxu0 0.0
    %355 = vmatprep.subr.mxu0 0.0
    %356 = vmatpush1.msra.mxu0 0.0
    %357 = vmatprep.subr.mxu0 0.0
    %358 = vmatpush1.msra.mxu0 0.0
    %359 = vmatprep.subr.mxu0 0.0
    %360 = vmatpush1.msra.mxu0 0.0
    %361 = vmatprep.subr.mxu0 0.0
    %362 = vmatpush1.msra.mxu0 0.0
    %363 = vmatprep.subr.mxu0 0.0
    %364 = vmatpush1.msra.mxu0 0.0
    %365 = vmatprep.subr.mxu0 0.0
    %366 = vmatpush1.msra.mxu0 0.0
    %367 = vmatprep.subr.mxu0 0.0
    %368 = vmatpush1.msra.mxu0 0.0
    %369 = vmatprep.subr.mxu0 0.0
    %370 = vmatpush1.msra.mxu0 0.0
    %371 = vmatprep.subr.mxu0 0.0
    %372 = vmatpush1.msra.mxu0 0.0
    %373 = vmatprep.subr.mxu0 0.0
    %374 = vmatpush1.msra.mxu0 0.0
    %375 = vmatprep.subr.mxu0 0.0
    %376 = vmatpush1.msra.mxu0 0.0
    %377 = vmatprep.subr.mxu0 0.0
    %378 = vmatpush1.msra.mxu0 0.0
    %379 = vmatprep.subr.mxu0 0.0
    %380 = vmatpush1.msra.mxu0 0.0
    %381 = vmatprep.subr.mxu0 0.0
    %382 = vmatpush1.msra.mxu0 0.0
    %383 = vmatprep.subr.mxu0 0.0
    %384 = vmatpush1.msra.mxu0 0.0
    %385 = vmatprep.subr.mxu0 0.0
    %386 = vmatpush1.msra.mxu0 0.0
    %387 = vmatprep.subr.mxu0 0.0
    %388 = vmatpush1.msra.mxu0 0.0
    %389 = vmatprep.subr.mxu0 0.0
    %390 = vmatpush1.msra.mxu0 0.0
    %391 = vmatprep.mubr.f32.mxu0 0.0
    %392 = vmatmul.mubr.f32.gmra.mrb[0].mxu0 %v325
    %v393 = vpop.f32.mrb[0].mxu0
    %v394 = vadd.f32 0.0, %v393
    %v395 = vpop.f32.mrb[0].mxu0
    %396 = vdwg.mxu0
    %v398 = vrot.slane %v296, 6
    %v400 = vadd.f32 %v121, %v398
    %v401 = vtanh.pop %v400
    %v402 = vmul.f32 %v401, 0.5
    %v403 = vadd.f32 %v402, 0.5
    %v405 = vrot.slane %v217, 6
    %v407 = vmul.f32 %v403, %v405
    %409 = vrot.lane.b32.xlu0 %v401, 32
    %v410 = vpop.permute.xlu0 %409
    %v412 = vmul.f32 %v403, %v410
    %414 = vrot.lane.b32.xlu0 %v412, 32
    %v415 = vpop.permute.xlu0 %414
    %v417 = vadd.f32 %v407, %v415
    %v418 = vtanh.pop %v417
    %420 = vrot.lane.b32.xlu0 %v418, 32
    %v421 = vpop.permute.xlu0 %420
    %v423 = vmul.f32 %v403, %v421
    %v425 = vrot.slane %v423, 2
    %426 = vrot.lane.b32.xlu0 %v425, 64
    %v427 = vpop.permute.xlu0 %426
    %v428 = vsel %vm129, %v427, 0
    %430 = vmatprep.subr.mxu0 %v29
    %431 = vmatpush1.msra.mxu0 %v28
    %432 = vmatprep.subr.mxu0 %v31
    %433 = vmatpush1.msra.mxu0 %v30
    %434 = vmatprep.subr.mxu0 %v33
    %435 = vmatpush1.msra.mxu0 %v32
    %436 = vmatprep.subr.mxu0 %v35
    %437 = vmatpush1.msra.mxu0 %v34
    %438 = vmatprep.subr.mxu0 0.0
    %439 = vmatpush1.msra.mxu0 0.0
    %440 = vmatprep.subr.mxu0 0.0
    %441 = vmatpush1.msra.mxu0 0.0
    %442 = vmatprep.subr.mxu0 0.0
    %443 = vmatpush1.msra.mxu0 0.0
    %444 = vmatprep.subr.mxu0 0.0
    %445 = vmatpush1.msra.mxu0 0.0
    %446 = vmatprep.subr.mxu0 0.0
    %447 = vmatpush1.msra.mxu0 0.0
    %448 = vmatprep.subr.mxu0 0.0
    %449 = vmatpush1.msra.mxu0 0.0
    %450 = vmatprep.subr.mxu0 0.0
    %451 = vmatpush1.msra.mxu0 0.0
    %452 = vmatprep.subr.mxu0 0.0
    %453 = vmatpush1.msra.mxu0 0.0
    %454 = vmatprep.subr.mxu0 0.0
    %455 = vmatpush1.msra.mxu0 0.0
    %456 = vmatprep.subr.mxu0 0.0
    %457 = vmatpush1.msra.mxu0 0.0
    %458 = vmatprep.subr.mxu0 0.0
    %459 = vmatpush1.msra.mxu0 0.0
    %460 = vmatprep.subr.mxu0 0.0
    %461 = vmatpush1.msra.mxu0 0.0
    %462 = vmatprep.subr.mxu0 0.0
    %463 = vmatpush1.msra.mxu0 0.0
    %464 = vmatprep.subr.mxu0 0.0
    %465 = vmatpush1.msra.mxu0 0.0
    %466 = vmatprep.subr.mxu0 0.0
    %467 = vmatpush1.msra.mxu0 0.0
    %468 = vmatprep.subr.mxu0 0.0
    %469 = vmatpush1.msra.mxu0 0.0
    %470 = vmatprep.subr.mxu0 0.0
    %471 = vmatpush1.msra.mxu0 0.0
    %472 = vmatprep.subr.mxu0 0.0
    %473 = vmatpush1.msra.mxu0 0.0
    %474 = vmatprep.subr.mxu0 0.0
    %475 = vmatpush1.msra.mxu0 0.0
    %476 = vmatprep.subr.mxu0 0.0
    %477 = vmatpush1.msra.mxu0 0.0
    %478 = vmatprep.subr.mxu0 0.0
    %479 = vmatpush1.msra.mxu0 0.0
    %480 = vmatprep.subr.mxu0 0.0
    %481 = vmatpush1.msra.mxu0 0.0
    %482 = vmatprep.subr.mxu0 0.0
    %483 = vmatpush1.msra.mxu0 0.0
    %484 = vmatprep.subr.mxu0 0.0
    %485 = vmatpush1.msra.mxu0 0.0
    %486 = vmatprep.subr.mxu0 0.0
    %487 = vmatpush1.msra.mxu0 0.0
    %488 = vmatprep.subr.mxu0 0.0
    %489 = vmatpush1.msra.mxu0 0.0
    %490 = vmatprep.subr.mxu0 0.0
    %491 = vmatpush1.msra.mxu0 0.0
    %492 = vmatprep.subr.mxu0 0.0
    %493 = vmatpush1.msra.mxu0 0.0
    %494 = vmatprep.mubr.f32.mxu0 0.0
    %495 = vmatmul.mubr.f32.gmra.mrb[0].mxu0 %v428
    %v496 = vpop.f32.mrb[0].mxu0
    %v497 = vadd.f32 0.0, %v496
    %v498 = vpop.f32.mrb[0].mxu0
    %v499 = vadd.f32 0.0, %v498
    %500 = vdwg.mxu0
    %v501 = vadd.f32 %v499, %v394
    %v502 = vadd.f32 %v501, %v40
    %v503 = vtanh.pop %v502
    %v504 = vmul.f32 %v503, 0.5
    %v505 = vadd.f32 %v504, 0.5
    %v506 = vmul.f32 %v505, %v315
    %508 = vrot.lane.b32.xlu0 %v503, 32
    %v509 = vpop.permute.xlu0 %508
    %v511 = vmul.f32 %v505, %v509
    %513 = vrot.lane.b32.xlu0 %v511, 32
    %v514 = vpop.permute.xlu0 %513
    %v516 = vadd.f32 %v506, %v514
    %v517 = vtanh.pop %v516
    %519 = vrot.lane.b32.xlu0 %v517, 32
    %v520 = vpop.permute.xlu0 %519
    %v522 = vmul.f32 %v505, %v520
    %524 = vrot.lane.b32.xlu0 %v522, 64
    %v525 = vpop.permute.xlu0 %524
    %v526 = vsel %vm129, %v525, 0
    %528 = vmatprep.subr.mxu0 0.0
    %529 = vmatpush1.msra.mxu0 %v36
    %530 = vmatprep.subr.mxu0 0.0
    %531 = vmatpush1.msra.mxu0 %v37
    %532 = vmatprep.subr.mxu0 0.0
    %533 = vmatpush1.msra.mxu0 %v38
    %534 = vmatprep.subr.mxu0 0.0
    %535 = vmatpush1.msra.mxu0 %v39
    %536 = vmatprep.subr.mxu0 0.0
    %537 = vmatpush1.msra.mxu0 0.0
    %538 = vmatprep.subr.mxu0 0.0
    %539 = vmatpush1.msra.mxu0 0.0
    %540 = vmatprep.subr.mxu0 0.0
    %541 = vmatpush1.msra.mxu0 0.0
    %542 = vmatprep.subr.mxu0 0.0
    %543 = vmatpush1.msra.mxu0 0.0
    %544 = vmatprep.subr.mxu0 0.0
    %545 = vmatpush1.msra.mxu0 0.0
    %546 = vmatprep.subr.mxu0 0.0
    %547 = vmatpush1.msra.mxu0 0.0
    %548 = vmatprep.subr.mxu0 0.0
    %549 = vmatpush1.msra.mxu0 0.0
    %550 = vmatprep.subr.mxu0 0.0
    %551 = vmatpush1.msra.mxu0 0.0
    %552 = vmatprep.subr.mxu0 0.0
    %553 = vmatpush1.msra.mxu0 0.0
    %554 = vmatprep.subr.mxu0 0.0
    %555 = vmatpush1.msra.mxu0 0.0
    %556 = vmatprep.subr.mxu0 0.0
    %557 = vmatpush1.msra.mxu0 0.0
    %558 = vmatprep.subr.mxu0 0.0
    %559 = vmatpush1.msra.mxu0 0.0
    %560 = vmatprep.subr.mxu0 0.0
    %561 = vmatpush1.msra.mxu0 0.0
    %562 = vmatprep.subr.mxu0 0.0
    %563 = vmatpush1.msra.mxu0 0.0
    %564 = vmatprep.subr.mxu0 0.0
    %565 = vmatpush1.msra.mxu0 0.0
    %566 = vmatprep.subr.mxu0 0.0
    %567 = vmatpush1.msra.mxu0 0.0
    %568 = vmatprep.subr.mxu0 0.0
    %569 = vmatpush1.msra.mxu0 0.0
    %570 = vmatprep.subr.mxu0 0.0
    %571 = vmatpush1.msra.mxu0 0.0
    %572 = vmatprep.subr.mxu0 0.0
    %573 = vmatpush1.msra.mxu0 0.0
    %574 = vmatprep.subr.mxu0 0.0
    %575 = vmatpush1.msra.mxu0 0.0
    %576 = vmatprep.subr.mxu0 0.0
    %577 = vmatpush1.msra.mxu0 0.0
    %578 = vmatprep.subr.mxu0 0.0
    %579 = vmatpush1.msra.mxu0 0.0
    %580 = vmatprep.subr.mxu0 0.0
    %581 = vmatpush1.msra.mxu0 0.0
    %582 = vmatprep.subr.mxu0 0.0
    %583 = vmatpush1.msra.mxu0 0.0
    %584 = vmatprep.subr.mxu0 0.0
    %585 = vmatpush1.msra.mxu0 0.0
    %586 = vmatprep.subr.mxu0 0.0
    %587 = vmatpush1.msra.mxu0 0.0
    %588 = vmatprep.subr.mxu0 0.0
    %589 = vmatpush1.msra.mxu0 0.0
    %590 = vmatprep.subr.mxu0 0.0
    %591 = vmatpush1.msra.mxu0 0.0
    %592 = vmatprep.mubr.f32.mxu0 0.0
    %593 = vmatmul.mubr.f32.gmra.mrb[0].mxu0 %v526
    %v594 = vpop.f32.mrb[0].mxu0
    %v595 = vadd.f32 0.0, %v594
    %v596 = vpop.f32.mrb[0].mxu0
    %597 = vdwg.mxu0
    %v599 = vrot.slane %v497, 4
    %v601 = vadd.f32 %v121, %v599
    %v602 = vtanh.pop %v601
    %v603 = vmul.f32 %v602, 0.5
    %v604 = vadd.f32 %v603, 0.5
    %v606 = vrot.slane %v417, 6
    %v608 = vmul.f32 %v604, %v606
    %610 = vrot.lane.b32.xlu0 %v602, 32
    %v611 = vpop.permute.xlu0 %610
    %v613 = vmul.f32 %v604, %v611
    %615 = vrot.lane.b32.xlu0 %v613, 32
    %v616 = vpop.permute.xlu0 %615
    %v618 = vadd.f32 %v608, %v616
    %v619 = vtanh.pop %v618
    %621 = vrot.lane.b32.xlu0 %v619, 32
    %v622 = vpop.permute.xlu0 %621
    %v624 = vmul.f32 %v604, %v622
    %v626 = vrot.slane %v624, 4
    %627 = vrot.lane.b32.xlu0 %v626, 64
    %v628 = vpop.permute.xlu0 %627
    %v629 = vsel %vm129, %v628, 0
    %631 = vmatprep.subr.mxu0 %v29
    %632 = vmatpush1.msra.mxu0 %v28
    %633 = vmatprep.subr.mxu0 %v31
    %634 = vmatpush1.msra.mxu0 %v30
    %635 = vmatprep.subr.mxu0 %v33
    %636 = vmatpush1.msra.mxu0 %v32
    %637 = vmatprep.subr.mxu0 %v35
    %638 = vmatpush1.msra.mxu0 %v34
    %639 = vmatprep.subr.mxu0 0.0
    %640 = vmatpush1.msra.mxu0 0.0
    %641 = vmatprep.subr.mxu0 0.0
    %642 = vmatpush1.msra.mxu0 0.0
    %643 = vmatprep.subr.mxu0 0.0
    %644 = vmatpush1.msra.mxu0 0.0
    %645 = vmatprep.subr.mxu0 0.0
    %646 = vmatpush1.msra.mxu0 0.0
    %647 = vmatprep.subr.mxu0 0.0
    %648 = vmatpush1.msra.mxu0 0.0
    %649 = vmatprep.subr.mxu0 0.0
    %650 = vmatpush1.msra.mxu0 0.0
    %651 = vmatprep.subr.mxu0 0.0
    %652 = vmatpush1.msra.mxu0 0.0
    %653 = vmatprep.subr.mxu0 0.0
    %654 = vmatpush1.msra.mxu0 0.0
    %655 = vmatprep.subr.mxu0 0.0
    %656 = vmatpush1.msra.mxu0 0.0
    %657 = vmatprep.subr.mxu0 0.0
    %658 = vmatpush1.msra.mxu0 0.0
    %659 = vmatprep.subr.mxu0 0.0
    %660 = vmatpush1.msra.mxu0 0.0
    %661 = vmatprep.subr.mxu0 0.0
    %662 = vmatpush1.msra.mxu0 0.0
    %663 = vmatprep.subr.mxu0 0.0
    %664 = vmatpush1.msra.mxu0 0.0
    %665 = vmatprep.subr.mxu0 0.0
    %666 = vmatpush1.msra.mxu0 0.0
    %667 = vmatprep.subr.mxu0 0.0
    %668 = vmatpush1.msra.mxu0 0.0
    %669 = vmatprep.subr.mxu0 0.0
    %670 = vmatpush1.msra.mxu0 0.0
    %671 = vmatprep.subr.mxu0 0.0
    %672 = vmatpush1.msra.mxu0 0.0
    %673 = vmatprep.subr.mxu0 0.0
    %674 = vmatpush1.msra.mxu0 0.0
    %675 = vmatprep.subr.mxu0 0.0
    %676 = vmatpush1.msra.mxu0 0.0
    %677 = vmatprep.subr.mxu0 0.0
    %678 = vmatpush1.msra.mxu0 0.0
    %679 = vmatprep.subr.mxu0 0.0
    %680 = vmatpush1.msra.mxu0 0.0
    %681 = vmatprep.subr.mxu0 0.0
    %682 = vmatpush1.msra.mxu0 0.0
    %683 = vmatprep.subr.mxu0 0.0
    %684 = vmatpush1.msra.mxu0 0.0
    %685 = vmatprep.subr.mxu0 0.0
    %686 = vmatpush1.msra.mxu0 0.0
    %687 = vmatprep.subr.mxu0 0.0
    %688 = vmatpush1.msra.mxu0 0.0
    %689 = vmatprep.subr.mxu0 0.0
    %690 = vmatpush1.msra.mxu0 0.0
    %691 = vmatprep.subr.mxu0 0.0
    %692 = vmatpush1.msra.mxu0 0.0
    %693 = vmatprep.subr.mxu0 0.0
    %694 = vmatpush1.msra.mxu0 0.0
    %695 = vmatprep.mubr.f32.mxu0 0.0
    %696 = vmatmul.mubr.f32.gmra.mrb[0].mxu0 %v629
    %v697 = vpop.f32.mrb[0].mxu0
    %v698 = vadd.f32 0.0, %v697
    %v699 = vpop.f32.mrb[0].mxu0
    %v700 = vadd.f32 0.0, %v699
    %701 = vdwg.mxu0
    %v702 = vadd.f32 %v700, %v595
    %v703 = vadd.f32 %v702, %v40
    %v704 = vtanh.pop %v703
    %v705 = vmul.f32 %v704, 0.5
    %v706 = vadd.f32 %v705, 0.5
    %v707 = vmul.f32 %v706, %v516
    %709 = vrot.lane.b32.xlu0 %v704, 32
    %v710 = vpop.permute.xlu0 %709
    %v712 = vmul.f32 %v706, %v710
    %714 = vrot.lane.b32.xlu0 %v712, 32
    %v715 = vpop.permute.xlu0 %714
    %v717 = vadd.f32 %v707, %v715
    %v718 = vtanh.pop %v717
    %720 = vrot.lane.b32.xlu0 %v718, 32
    %v721 = vpop.permute.xlu0 %720
    %v723 = vmul.f32 %v706, %v721
    %725 = vrot.lane.b32.xlu0 %v723, 64
    %v726 = vpop.permute.xlu0 %725
    %v727 = vsel %vm129, %v726, 0
    %729 = vmatprep.subr.mxu0 0.0
    %730 = vmatpush1.msra.mxu0 %v36
    %731 = vmatprep.subr.mxu0 0.0
    %732 = vmatpush1.msra.mxu0 %v37
    %733 = vmatprep.subr.mxu0 0.0
    %734 = vmatpush1.msra.mxu0 %v38
    %735 = vmatprep.subr.mxu0 0.0
    %736 = vmatpush1.msra.mxu0 %v39
    %737 = vmatprep.subr.mxu0 0.0
    %738 = vmatpush1.msra.mxu0 0.0
    %739 = vmatprep.subr.mxu0 0.0
    %740 = vmatpush1.msra.mxu0 0.0
    %741 = vmatprep.subr.mxu0 0.0
    %742 = vmatpush1.msra.mxu0 0.0
    %743 = vmatprep.subr.mxu0 0.0
    %744 = vmatpush1.msra.mxu0 0.0
    %745 = vmatprep.subr.mxu0 0.0
    %746 = vmatpush1.msra.mxu0 0.0
    %747 = vmatprep.subr.mxu0 0.0
    %748 = vmatpush1.msra.mxu0 0.0
    %749 = vmatprep.subr.mxu0 0.0
    %750 = vmatpush1.msra.mxu0 0.0
    %751 = vmatprep.subr.mxu0 0.0
    %752 = vmatpush1.msra.mxu0 0.0
    %753 = vmatprep.subr.mxu0 0.0
    %754 = vmatpush1.msra.mxu0 0.0
    %755 = vmatprep.subr.mxu0 0.0
    %756 = vmatpush1.msra.mxu0 0.0
    %757 = vmatprep.subr.mxu0 0.0
    %758 = vmatpush1.msra.mxu0 0.0
    %759 = vmatprep.subr.mxu0 0.0
    %760 = vmatpush1.msra.mxu0 0.0
    %761 = vmatprep.subr.mxu0 0.0
    %762 = vmatpush1.msra.mxu0 0.0
    %763 = vmatprep.subr.mxu0 0.0
    %764 = vmatpush1.msra.mxu0 0.0
    %765 = vmatprep.subr.mxu0 0.0
    %766 = vmatpush1.msra.mxu0 0.0
    %767 = vmatprep.subr.mxu0 0.0
    %768 = vmatpush1.msra.mxu0 0.0
    %769 = vmatprep.subr.mxu0 0.0
    %770 = vmatpush1.msra.mxu0 0.0
    %771 = vmatprep.subr.mxu0 0.0
    %772 = vmatpush1.msra.mxu0 0.0
    %773 = vmatprep.subr.mxu0 0.0
    %774 = vmatpush1.msra.mxu0 0.0
    %775 = vmatprep.subr.mxu0 0.0
    %776 = vmatpush1.msra.mxu0 0.0
    %777 = vmatprep.subr.mxu0 0.0
    %778 = vmatpush1.msra.mxu0 0.0
    %779 = vmatprep.subr.mxu0 0.0
    %780 = vmatpush1.msra.mxu0 0.0
    %781 = vmatprep.subr.mxu0 0.0
    %782 = vmatpush1.msra.mxu0 0.0
    %783 = vmatprep.subr.mxu0 0.0
    %784 = vmatpush1.msra.mxu0 0.0
    %785 = vmatprep.subr.mxu0 0.0
    %786 = vmatpush1.msra.mxu0 0.0
    %787 = vmatprep.subr.mxu0 0.0
    %788 = vmatpush1.msra.mxu0 0.0
    %789 = vmatprep.subr.mxu0 0.0
    %790 = vmatpush1.msra.mxu0 0.0
    %791 = vmatprep.subr.mxu0 0.0
    %792 = vmatpush1.msra.mxu0 0.0
    %793 = vmatprep.mubr.f32.mxu0 0.0
    %794 = vmatmul.mubr.f32.gmra.mrb[0].mxu0 %v727
    %v795 = vpop.f32.mrb[0].mxu0
    %v796 = vadd.f32 0.0, %v795
    %v797 = vpop.f32.mrb[0].mxu0
    %798 = vdwg.mxu0
    %v800 = vrot.slane %v698, 2
    %v802 = vadd.f32 %v121, %v800
    %v803 = vtanh.pop %v802
    %v804 = vmul.f32 %v803, 0.5
    %v805 = vadd.f32 %v804, 0.5
    %v807 = vrot.slane %v618, 6
    %v809 = vmul.f32 %v805, %v807
    %811 = vrot.lane.b32.xlu0 %v803, 32
    %v812 = vpop.permute.xlu0 %811
    %v814 = vmul.f32 %v805, %v812
    %816 = vrot.lane.b32.xlu0 %v814, 32
    %v817 = vpop.permute.xlu0 %816
    %v819 = vadd.f32 %v809, %v817
    %v820 = vtanh.pop %v819
    %822 = vrot.lane.b32.xlu0 %v820, 32
    %v823 = vpop.permute.xlu0 %822
    %v825 = vmul.f32 %v805, %v823
    %v827 = vrot.slane %v825, 6
    %828 = vrot.lane.b32.xlu0 %v827, 64
    %v829 = vpop.permute.xlu0 %828
    %v830 = vsel %vm129, %v829, 0
    %832 = vmatprep.subr.mxu0 %v29
    %833 = vmatpush1.msra.mxu0 %v28
    %834 = vmatprep.subr.mxu0 %v31
    %835 = vmatpush1.msra.mxu0 %v30
    %836 = vmatprep.subr.mxu0 %v33
    %837 = vmatpush1.msra.mxu0 %v32
    %838 = vmatprep.subr.mxu0 %v35
    %839 = vmatpush1.msra.mxu0 %v34
    %840 = vmatprep.subr.mxu0 0.0
    %841 = vmatpush1.msra.mxu0 0.0
    %842 = vmatprep.subr.mxu0 0.0
    %843 = vmatpush1.msra.mxu0 0.0
    %844 = vmatprep.subr.mxu0 0.0
    %845 = vmatpush1.msra.mxu0 0.0
    %846 = vmatprep.subr.mxu0 0.0
    %847 = vmatpush1.msra.mxu0 0.0
    %848 = vmatprep.subr.mxu0 0.0
    %849 = vmatpush1.msra.mxu0 0.0
    %850 = vmatprep.subr.mxu0 0.0
    %851 = vmatpush1.msra.mxu0 0.0
    %852 = vmatprep.subr.mxu0 0.0
    %853 = vmatpush1.msra.mxu0 0.0
    %854 = vmatprep.subr.mxu0 0.0
    %855 = vmatpush1.msra.mxu0 0.0
    %856 = vmatprep.subr.mxu0 0.0
    %857 = vmatpush1.msra.mxu0 0.0
    %858 = vmatprep.subr.mxu0 0.0
    %859 = vmatpush1.msra.mxu0 0.0
    %860 = vmatprep.subr.mxu0 0.0
    %861 = vmatpush1.msra.mxu0 0.0
    %862 = vmatprep.subr.mxu0 0.0
    %863 = vmatpush1.msra.mxu0 0.0
    %864 = vmatprep.subr.mxu0 0.0
    %865 = vmatpush1.msra.mxu0 0.0
    %866 = vmatprep.subr.mxu0 0.0
    %867 = vmatpush1.msra.mxu0 0.0
    %868 = vmatprep.subr.mxu0 0.0
    %869 = vmatpush1.msra.mxu0 0.0
    %870 = vmatprep.subr.mxu0 0.0
    %871 = vmatpush1.msra.mxu0 0.0
    %872 = vmatprep.subr.mxu0 0.0
    %873 = vmatpush1.msra.mxu0 0.0
    %874 = vmatprep.subr.mxu0 0.0
    %875 = vmatpush1.msra.mxu0 0.0
    %876 = vmatprep.subr.mxu0 0.0
    %877 = vmatpush1.msra.mxu0 0.0
    %878 = vmatprep.subr.mxu0 0.0
    %879 = vmatpush1.msra.mxu0 0.0
    %880 = vmatprep.subr.mxu0 0.0
    %881 = vmatpush1.msra.mxu0 0.0
    %882 = vmatprep.subr.mxu0 0.0
    %883 = vmatpush1.msra.mxu0 0.0
    %884 = vmatprep.subr.mxu0 0.0
    %885 = vmatpush1.msra.mxu0 0.0
    %886 = vmatprep.subr.mxu0 0.0
    %887 = vmatpush1.msra.mxu0 0.0
    %888 = vmatprep.subr.mxu0 0.0
    %889 = vmatpush1.msra.mxu0 0.0
    %890 = vmatprep.subr.mxu0 0.0
    %891 = vmatpush1.msra.mxu0 0.0
    %892 = vmatprep.subr.mxu0 0.0
    %893 = vmatpush1.msra.mxu0 0.0
    %894 = vmatprep.subr.mxu0 0.0
    %895 = vmatpush1.msra.mxu0 0.0
    %896 = vmatprep.mubr.f32.mxu0 0.0
    %897 = vmatmul.mubr.f32.gmra.mrb[0].mxu0 %v830
    %v898 = vpop.f32.mrb[0].mxu0
    %v899 = vadd.f32 0.0, %v898
    %v900 = vpop.f32.mrb[0].mxu0
    %v901 = vadd.f32 0.0, %v900
    %902 = vdwg.mxu0
    %v903 = vadd.f32 %v901, %v796
    %v904 = vadd.f32 %v903, %v40
    %v905 = vtanh.pop %v904
    %v906 = vmul.f32 %v905, 0.5
    %v907 = vadd.f32 %v906, 0.5
    %v908 = vmul.f32 %v907, %v717
    %910 = vrot.lane.b32.xlu0 %v905, 32
    %v911 = vpop.permute.xlu0 %910
    %v913 = vmul.f32 %v907, %v911
    %915 = vrot.lane.b32.xlu0 %v913, 32
    %v916 = vpop.permute.xlu0 %915
    %v918 = vadd.f32 %v908, %v916
    %v919 = vtanh.pop %v918
    %921 = vrot.lane.b32.xlu0 %v919, 32
    %v922 = vpop.permute.xlu0 %921
    %v924 = vmul.f32 %v907, %v922
    %926 = vrot.lane.b32.xlu0 %v924, 64
    %v927 = vpop.permute.xlu0 %926
    %v928 = vsel %vm129, %v927, 0
    %930 = vmatprep.subr.mxu0 0.0
    %931 = vmatpush1.msra.mxu0 %v36
    %932 = vmatprep.subr.mxu0 0.0
    %933 = vmatpush1.msra.mxu0 %v37
    %934 = vmatprep.subr.mxu0 0.0
    %935 = vmatpush1.msra.mxu0 %v38
    %936 = vmatprep.subr.mxu0 0.0
    %937 = vmatpush1.msra.mxu0 %v39
    %938 = vmatprep.subr.mxu0 0.0
    %939 = vmatpush1.msra.mxu0 0.0
    %940 = vmatprep.subr.mxu0 0.0
    %941 = vmatpush1.msra.mxu0 0.0
    %942 = vmatprep.subr.mxu0 0.0
    %943 = vmatpush1.msra.mxu0 0.0
    %944 = vmatprep.subr.mxu0 0.0
    %945 = vmatpush1.msra.mxu0 0.0
    %946 = vmatprep.subr.mxu0 0.0
    %947 = vmatpush1.msra.mxu0 0.0
    %948 = vmatprep.subr.mxu0 0.0
    %949 = vmatpush1.msra.mxu0 0.0
    %950 = vmatprep.subr.mxu0 0.0
    %951 = vmatpush1.msra.mxu0 0.0
    %952 = vmatprep.subr.mxu0 0.0
    %953 = vmatpush1.msra.mxu0 0.0
    %954 = vmatprep.subr.mxu0 0.0
    %955 = vmatpush1.msra.mxu0 0.0
    %956 = vmatprep.subr.mxu0 0.0
    %957 = vmatpush1.msra.mxu0 0.0
    %958 = vmatprep.subr.mxu0 0.0
    %959 = vmatpush1.msra.mxu0 0.0
    %960 = vmatprep.subr.mxu0 0.0
    %961 = vmatpush1.msra.mxu0 0.0
    %962 = vmatprep.subr.mxu0 0.0
    %963 = vmatpush1.msra.mxu0 0.0
    %964 = vmatprep.subr.mxu0 0.0
    %965 = vmatpush1.msra.mxu0 0.0
    %966 = vmatprep.subr.mxu0 0.0
    %967 = vmatpush1.msra.mxu0 0.0
    %968 = vmatprep.subr.mxu0 0.0
    %969 = vmatpush1.msra.mxu0 0.0
    %970 = vmatprep.subr.mxu0 0.0
    %971 = vmatpush1.msra.mxu0 0.0
    %972 = vmatprep.subr.mxu0 0.0
    %973 = vmatpush1.msra.mxu0 0.0
    %974 = vmatprep.subr.mxu0 0.0
    %975 = vmatpush1.msra.mxu0 0.0
    %976 = vmatprep.subr.mxu0 0.0
    %977 = vmatpush1.msra.mxu0 0.0
    %978 = vmatprep.subr.mxu0 0.0
    %979 = vmatpush1.msra.mxu0 0.0
    %980 = vmatprep.subr.mxu0 0.0
    %981 = vmatpush1.msra.mxu0 0.0
    %982 = vmatprep.subr.mxu0 0.0
    %983 = vmatpush1.msra.mxu0 0.0
    %984 = vmatprep.subr.mxu0 0.0
    %985 = vmatpush1.msra.mxu0 0.0
    %986 = vmatprep.subr.mxu0 0.0
    %987 = vmatpush1.msra.mxu0 0.0
    %988 = vmatprep.subr.mxu0 0.0
    %989 = vmatpush1.msra.mxu0 0.0
    %990 = vmatprep.subr.mxu0 0.0
    %991 = vmatpush1.msra.mxu0 0.0
    %992 = vmatprep.subr.mxu0 0.0
    %993 = vmatpush1.msra.mxu0 0.0
    %994 = vmatprep.mubr.f32.mxu0 0.0
    %995 = vmatmul.mubr.f32.gmra.mrb[0].mxu0 %v928
    %v996 = vpop.f32.mrb[0].mxu0
    %v997 = vadd.f32 0.0, %v996
    %v998 = vpop.f32.mrb[0].mxu0
    %999 = vdwg.mxu0
    %v1000 = vadd.f32 %v126, %v899
    %v1001 = vtanh.pop %v1000
    %v1002 = vmul.f32 %v1001, 0.5
    %v1003 = vadd.f32 %v1002, 0.5
    %v1005 = vrot.slane %v819, 6
    %v1007 = vmul.f32 %v1003, %v1005
    %1009 = vrot.lane.b32.xlu0 %v1001, 32
    %v1010 = vpop.permute.xlu0 %1009
    %v1012 = vmul.f32 %v1003, %v1010
    %1014 = vrot.lane.b32.xlu0 %v1012, 32
    %v1015 = vpop.permute.xlu0 %1014
    %v1017 = vadd.f32 %v1007, %v1015
    %v1018 = vtanh.pop %v1017
    %1020 = vrot.lane.b32.xlu0 %v1018, 32
    %v1021 = vpop.permute.xlu0 %1020
    %v1023 = vmul.f32 %v1003, %v1021
    %1025 = vrot.lane.b32.xlu0 %v1023, 64
    %v1026 = vpop.permute.xlu0 %1025
    %v1027 = vsel %vm129, %v1026, 0
    %1029 = vmatprep.subr.mxu0 %v29
    %1030 = vmatpush1.msra.mxu0 %v28
    %1031 = vmatprep.subr.mxu0 %v31
    %1032 = vmatpush1.msra.mxu0 %v30
    %1033 = vmatprep.subr.mxu0 %v33
    %1034 = vmatpush1.msra.mxu0 %v32
    %1035 = vmatprep.subr.mxu0 %v35
    %1036 = vmatpush1.msra.mxu0 %v34
    %1037 = vmatprep.subr.mxu0 0.0
    %1038 = vmatpush1.msra.mxu0 0.0
    %1039 = vmatprep.subr.mxu0 0.0
    %1040 = vmatpush1.msra.mxu0 0.0
    %1041 = vmatprep.subr.mxu0 0.0
    %1042 = vmatpush1.msra.mxu0 0.0
    %1043 = vmatprep.subr.mxu0 0.0
    %1044 = vmatpush1.msra.mxu0 0.0
    %1045 = vmatprep.subr.mxu0 0.0
    %1046 = vmatpush1.msra.mxu0 0.0
    %1047 = vmatprep.subr.mxu0 0.0
    %1048 = vmatpush1.msra.mxu0 0.0
    %1049 = vmatprep.subr.mxu0 0.0
    %1050 = vmatpush1.msra.mxu0 0.0
    %1051 = vmatprep.subr.mxu0 0.0
    %1052 = vmatpush1.msra.mxu0 0.0
    %1053 = vmatprep.subr.mxu0 0.0
    %1054 = vmatpush1.msra.mxu0 0.0
    %1055 = vmatprep.subr.mxu0 0.0
    %1056 = vmatpush1.msra.mxu0 0.0
    %1057 = vmatprep.subr.mxu0 0.0
    %1058 = vmatpush1.msra.mxu0 0.0
    %1059 = vmatprep.subr.mxu0 0.0
    %1060 = vmatpush1.msra.mxu0 0.0
    %1061 = vmatprep.subr.mxu0 0.0
    %1062 = vmatpush1.msra.mxu0 0.0
    %1063 = vmatprep.subr.mxu0 0.0
    %1064 = vmatpush1.msra.mxu0 0.0
    %1065 = vmatprep.subr.mxu0 0.0
    %1066 = vmatpush1.msra.mxu0 0.0
    %1067 = vmatprep.subr.mxu0 0.0
    %1068 = vmatpush1.msra.mxu0 0.0
    %1069 = vmatprep.subr.mxu0 0.0
    %1070 = vmatpush1.msra.mxu0 0.0
    %1071 = vmatprep.subr.mxu0 0.0
    %1072 = vmatpush1.msra.mxu0 0.0
    %1073 = vmatprep.subr.mxu0 0.0
    %1074 = vmatpush1.msra.mxu0 0.0
    %1075 = vmatprep.subr.mxu0 0.0
    %1076 = vmatpush1.msra.mxu0 0.0
    %1077 = vmatprep.subr.mxu0 0.0
    %1078 = vmatpush1.msra.mxu0 0.0
    %1079 = vmatprep.subr.mxu0 0.0
    %1080 = vmatpush1.msra.mxu0 0.0
    %1081 = vmatprep.subr.mxu0 0.0
    %1082 = vmatpush1.msra.mxu0 0.0
    %1083 = vmatprep.subr.mxu0 0.0
    %1084 = vmatpush1.msra.mxu0 0.0
    %1085 = vmatprep.subr.mxu0 0.0
    %1086 = vmatpush1.msra.mxu0 0.0
    %1087 = vmatprep.subr.mxu0 0.0
    %1088 = vmatpush1.msra.mxu0 0.0
    %1089 = vmatprep.subr.mxu0 0.0
    %1090 = vmatpush1.msra.mxu0 0.0
    %1091 = vmatprep.subr.mxu0 0.0
    %1092 = vmatpush1.msra.mxu0 0.0
    %1093 = vmatprep.mubr.f32.mxu0 0.0
    %1094 = vmatmul.mubr.f32.gmra.mrb[0].mxu0 %v1027
    %v1095 = vpop.f32.mrb[0].mxu0
    %v1096 = vadd.f32 0.0, %v1095
    %v1097 = vpop.f32.mrb[0].mxu0
    %v1098 = vadd.f32 0.0, %v1097
    %1099 = vdwg.mxu0
    %v1100 = vadd.f32 %v1098, %v997
    %v1101 = vadd.f32 %v1100, %v40
    %v1102 = vtanh.pop %v1101
    %v1103 = vmul.f32 %v1102, 0.5
    %v1104 = vadd.f32 %v1103, 0.5
    %v1105 = vmul.f32 %v1104, %v918
    %1107 = vrot.lane.b32.xlu0 %v1102, 32
    %v1108 = vpop.permute.xlu0 %1107
    %v1110 = vmul.f32 %v1104, %v1108
    %1112 = vrot.lane.b32.xlu0 %v1110, 32
    %v1113 = vpop.permute.xlu0 %1112
    %v1115 = vadd.f32 %v1105, %v1113
    %v1116 = vtanh.pop %v1115
    %1118 = vrot.lane.b32.xlu0 %v1116, 32
    %v1119 = vpop.permute.xlu0 %1118
    %v1121 = vmul.f32 %v1104, %v1119
    %1123 = vrot.lane.b32.xlu0 %v1121, 64
    %v1124 = vpop.permute.xlu0 %1123
    %v1125 = vsel %vm129, %v1124, 0
    %1127 = vmatprep.subr.mxu0 0.0
    %1128 = vmatpush1.msra.mxu0 %v36
    %1129 = vmatprep.subr.mxu0 0.0
    %1130 = vmatpush1.msra.mxu0 %v37
    %1131 = vmatprep.subr.mxu0 0.0
    %1132 = vmatpush1.msra.mxu0 %v38
    %1133 = vmatprep.subr.mxu0 0.0
    %1134 = vmatpush1.msra.mxu0 %v39
    %1135 = vmatprep.subr.mxu0 0.0
    %1136 = vmatpush1.msra.mxu0 0.0
    %1137 = vmatprep.subr.mxu0 0.0
    %1138 = vmatpush1.msra.mxu0 0.0
    %1139 = vmatprep.subr.mxu0 0.0
    %1140 = vmatpush1.msra.mxu0 0.0
    %1141 = vmatprep.subr.mxu0 0.0
    %1142 = vmatpush1.msra.mxu0 0.0
    %1143 = vmatprep.subr.mxu0 0.0
    %1144 = vmatpush1.msra.mxu0 0.0
    %1145 = vmatprep.subr.mxu0 0.0
    %1146 = vmatpush1.msra.mxu0 0.0
    %1147 = vmatprep.subr.mxu0 0.0
    %1148 = vmatpush1.msra.mxu0 0.0
    %1149 = vmatprep.subr.mxu0 0.0
    %1150 = vmatpush1.msra.mxu0 0.0
    %1151 = vmatprep.subr.mxu0 0.0
    %1152 = vmatpush1.msra.mxu0 0.0
    %1153 = vmatprep.subr.mxu0 0.0
    %1154 = vmatpush1.msra.mxu0 0.0
    %1155 = vmatprep.subr.mxu0 0.0
    %1156 = vmatpush1.msra.mxu0 0.0
    %1157 = vmatprep.subr.mxu0 0.0
    %1158 = vmatpush1.msra.mxu0 0.0
    %1159 = vmatprep.subr.mxu0 0.0
    %1160 = vmatpush1.msra.mxu0 0.0
    %1161 = vmatprep.subr.mxu0 0.0
    %1162 = vmatpush1.msra.mxu0 0.0
    %1163 = vmatprep.subr.mxu0 0.0
    %1164 = vmatpush1.msra.mxu0 0.0
    %1165 = vmatprep.subr.mxu0 0.0
    %1166 = vmatpush1.msra.mxu0 0.0
    %1167 = vmatprep.subr.mxu0 0.0
    %1168 = vmatpush1.msra.mxu0 0.0
    %1169 = vmatprep.subr.mxu0 0.0
    %1170 = vmatpush1.msra.mxu0 0.0
    %1171 = vmatprep.subr.mxu0 0.0
    %1172 = vmatpush1.msra.mxu0 0.0
    %1173 = vmatprep.subr.mxu0 0.0
    %1174 = vmatpush1.msra.mxu0 0.0
    %1175 = vmatprep.subr.mxu0 0.0
    %1176 = vmatpush1.msra.mxu0 0.0
    %1177 = vmatprep.subr.mxu0 0.0
    %1178 = vmatpush1.msra.mxu0 0.0
    %1179 = vmatprep.subr.mxu0 0.0
    %1180 = vmatpush1.msra.mxu0 0.0
    %1181 = vmatprep.subr.mxu0 0.0
    %1182 = vmatpush1.msra.mxu0 0.0
    %1183 = vmatprep.subr.mxu0 0.0
    %1184 = vmatpush1.msra.mxu0 0.0
    %1185 = vmatprep.subr.mxu0 0.0
    %1186 = vmatpush1.msra.mxu0 0.0
    %1187 = vmatprep.subr.mxu0 0.0
    %1188 = vmatpush1.msra.mxu0 0.0
    %1189 = vmatprep.subr.mxu0 0.0
    %1190 = vmatpush1.msra.mxu0 0.0
    %1191 = vmatprep.mubr.f32.mxu0 0.0
    %1192 = vmatmul.mubr.f32.gmra.mrb[0].mxu0 %v1125
    %v1193 = vpop.f32.mrb[0].mxu0
    %v1194 = vadd.f32 0.0, %v1193
    %v1195 = vpop.f32.mrb[0].mxu0
    %1196 = vdwg.mxu0
    %v1198 = vrot.slane %v1096, 6
    %v1200 = vadd.f32 %v126, %v1198
    %v1201 = vtanh.pop %v1200
    %v1202 = vmul.f32 %v1201, 0.5
    %v1203 = vadd.f32 %v1202, 0.5
    %v1205 = vrot.slane %v1017, 6
    %v1207 = vmul.f32 %v1203, %v1205
    %1209 = vrot.lane.b32.xlu0 %v1201, 32
    %v1210 = vpop.permute.xlu0 %1209
    %v1212 = vmul.f32 %v1203, %v1210
    %1214 = vrot.lane.b32.xlu0 %v1212, 32
    %v1215 = vpop.permute.xlu0 %1214
    %v1217 = vadd.f32 %v1207, %v1215
    %v1218 = vtanh.pop %v1217
    %1220 = vrot.lane.b32.xlu0 %v1218, 32
    %v1221 = vpop.permute.xlu0 %1220
    %v1223 = vmul.f32 %v1203, %v1221
    %v1225 = vrot.slane %v1223, 2
    %1226 = vrot.lane.b32.xlu0 %v1225, 64
    %v1227 = vpop.permute.xlu0 %1226
    %v1228 = vsel %vm129, %v1227, 0
    %1230 = vmatprep.subr.mxu0 %v29
    %1231 = vmatpush1.msra.mxu0 %v28
    %1232 = vmatprep.subr.mxu0 %v31
    %1233 = vmatpush1.msra.mxu0 %v30
    %1234 = vmatprep.subr.mxu0 %v33
    %1235 = vmatpush1.msra.mxu0 %v32
    %1236 = vmatprep.subr.mxu0 %v35
    %1237 = vmatpush1.msra.mxu0 %v34
    %1238 = vmatprep.subr.mxu0 0.0
    %1239 = vmatpush1.msra.mxu0 0.0
    %1240 = vmatprep.subr.mxu0 0.0
    %1241 = vmatpush1.msra.mxu0 0.0
    %1242 = vmatprep.subr.mxu0 0.0
    %1243 = vmatpush1.msra.mxu0 0.0
    %1244 = vmatprep.subr.mxu0 0.0
    %1245 = vmatpush1.msra.mxu0 0.0
    %1246 = vmatprep.subr.mxu0 0.0
    %1247 = vmatpush1.msra.mxu0 0.0
    %1248 = vmatprep.subr.mxu0 0.0
    %1249 = vmatpush1.msra.mxu0 0.0
    %1250 = vmatprep.subr.mxu0 0.0
    %1251 = vmatpush1.msra.mxu0 0.0
    %1252 = vmatprep.subr.mxu0 0.0
    %1253 = vmatpush1.msra.mxu0 0.0
    %1254 = vmatprep.subr.mxu0 0.0
    %1255 = vmatpush1.msra.mxu0 0.0
    %1256 = vmatprep.subr.mxu0 0.0
    %1257 = vmatpush1.msra.mxu0 0.0
    %1258 = vmatprep.subr.mxu0 0.0
    %1259 = vmatpush1.msra.mxu0 0.0
    %1260 = vmatprep.subr.mxu0 0.0
    %1261 = vmatpush1.msra.mxu0 0.0
    %1262 = vmatprep.subr.mxu0 0.0
    %1263 = vmatpush1.msra.mxu0 0.0
    %1264 = vmatprep.subr.mxu0 0.0
    %1265 = vmatpush1.msra.mxu0 0.0
    %1266 = vmatprep.subr.mxu0 0.0
    %1267 = vmatpush1.msra.mxu0 0.0
    %1268 = vmatprep.subr.mxu0 0.0
    %1269 = vmatpush1.msra.mxu0 0.0
    %1270 = vmatprep.subr.mxu0 0.0
    %1271 = vmatpush1.msra.mxu0 0.0
    %1272 = vmatprep.subr.mxu0 0.0
    %1273 = vmatpush1.msra.mxu0 0.0
    %1274 = vmatprep.subr.mxu0 0.0
    %1275 = vmatpush1.msra.mxu0 0.0
    %1276 = vmatprep.subr.mxu0 0.0
    %1277 = vmatpush1.msra.mxu0 0.0
    %1278 = vmatprep.subr.mxu0 0.0
    %1279 = vmatpush1.msra.mxu0 0.0
    %1280 = vmatprep.subr.mxu0 0.0
    %1281 = vmatpush1.msra.mxu0 0.0
    %1282 = vmatprep.subr.mxu0 0.0
    %1283 = vmatpush1.msra.mxu0 0.0
    %1284 = vmatprep.subr.mxu0 0.0
    %1285 = vmatpush1.msra.mxu0 0.0
    %1286 = vmatprep.subr.mxu0 0.0
    %1287 = vmatpush1.msra.mxu0 0.0
    %1288 = vmatprep.subr.mxu0 0.0
    %1289 = vmatpush1.msra.mxu0 0.0
    %1290 = vmatprep.subr.mxu0 0.0
    %1291 = vmatpush1.msra.mxu0 0.0
    %1292 = vmatprep.subr.mxu0 0.0
    %1293 = vmatpush1.msra.mxu0 0.0
    %1294 = vmatprep.mubr.f32.mxu0 0.0
    %1295 = vmatmul.mubr.f32.gmra.mrb[0].mxu0 %v1228
    %v1296 = vpop.f32.mrb[0].mxu0
    %v1297 = vadd.f32 0.0, %v1296
    %v1298 = vpop.f32.mrb[0].mxu0
    %v1299 = vadd.f32 0.0, %v1298
    %1300 = vdwg.mxu0
    %v1301 = vadd.f32 %v1299, %v1194
    %v1302 = vadd.f32 %v1301, %v40
    %v1303 = vtanh.pop %v1302
    %v1304 = vmul.f32 %v1303, 0.5
    %v1305 = vadd.f32 %v1304, 0.5
    %v1306 = vmul.f32 %v1305, %v1115
    %1308 = vrot.lane.b32.xlu0 %v1303, 32
    %v1309 = vpop.permute.xlu0 %1308
    %v1311 = vmul.f32 %v1305, %v1309
    %1313 = vrot.lane.b32.xlu0 %v1311, 32
    %v1314 = vpop.permute.xlu0 %1313
    %v1316 = vadd.f32 %v1306, %v1314
    %v1317 = vtanh.pop %v1316
    %1319 = vrot.lane.b32.xlu0 %v1317, 32
    %v1320 = vpop.permute.xlu0 %1319
    %v1322 = vmul.f32 %v1305, %v1320
    %1324 = vrot.lane.b32.xlu0 %v1322, 64
    %v1325 = vpop.permute.xlu0 %1324
    %v1326 = vsel %vm129, %v1325, 0
    %1328 = vmatprep.subr.mxu0 0.0
    %1329 = vmatpush1.msra.mxu0 %v36
    %1330 = vmatprep.subr.mxu0 0.0
    %1331 = vmatpush1.msra.mxu0 %v37
    %1332 = vmatprep.subr.mxu0 0.0
    %1333 = vmatpush1.msra.mxu0 %v38
    %1334 = vmatprep.subr.mxu0 0.0
    %1335 = vmatpush1.msra.mxu0 %v39
    %1336 = vmatprep.subr.mxu0 0.0
    %1337 = vmatpush1.msra.mxu0 0.0
    %1338 = vmatprep.subr.mxu0 0.0
    %1339 = vmatpush1.msra.mxu0 0.0
    %1340 = vmatprep.subr.mxu0 0.0
    %1341 = vmatpush1.msra.mxu0 0.0
    %1342 = vmatprep.subr.mxu0 0.0
    %1343 = vmatpush1.msra.mxu0 0.0
    %1344 = vmatprep.subr.mxu0 0.0
    %1345 = vmatpush1.msra.mxu0 0.0
    %1346 = vmatprep.subr.mxu0 0.0
    %1347 = vmatpush1.msra.mxu0 0.0
    %1348 = vmatprep.subr.mxu0 0.0
    %1349 = vmatpush1.msra.mxu0 0.0
    %1350 = vmatprep.subr.mxu0 0.0
    %1351 = vmatpush1.msra.mxu0 0.0
    %1352 = vmatprep.subr.mxu0 0.0
    %1353 = vmatpush1.msra.mxu0 0.0
    %1354 = vmatprep.subr.mxu0 0.0
    %1355 = vmatpush1.msra.mxu0 0.0
    %1356 = vmatprep.subr.mxu0 0.0
    %1357 = vmatpush1.msra.mxu0 0.0
    %1358 = vmatprep.subr.mxu0 0.0
    %1359 = vmatpush1.msra.mxu0 0.0
    %1360 = vmatprep.subr.mxu0 0.0
    %1361 = vmatpush1.msra.mxu0 0.0
    %1362 = vmatprep.subr.mxu0 0.0
    %1363 = vmatpush1.msra.mxu0 0.0
    %1364 = vmatprep.subr.mxu0 0.0
    %1365 = vmatpush1.msra.mxu0 0.0
    %1366 = vmatprep.subr.mxu0 0.0
    %1367 = vmatpush1.msra.mxu0 0.0
    %1368 = vmatprep.subr.mxu0 0.0
    %1369 = vmatpush1.msra.mxu0 0.0
    %1370 = vmatprep.subr.mxu0 0.0
    %1371 = vmatpush1.msra.mxu0 0.0
    %1372 = vmatprep.subr.mxu0 0.0
    %1373 = vmatpush1.msra.mxu0 0.0
    %1374 = vmatprep.subr.mxu0 0.0
    %1375 = vmatpush1.msra.mxu0 0.0
    %1376 = vmatprep.subr.mxu0 0.0
    %1377 = vmatpush1.msra.mxu0 0.0
    %1378 = vmatprep.subr.mxu0 0.0
    %1379 = vmatpush1.msra.mxu0 0.0
    %1380 = vmatprep.subr.mxu0 0.0
    %1381 = vmatpush1.msra.mxu0 0.0
    %1382 = vmatprep.subr.mxu0 0.0
    %1383 = vmatpush1.msra.mxu0 0.0
    %1384 = vmatprep.subr.mxu0 0.0
    %1385 = vmatpush1.msra.mxu0 0.0
    %1386 = vmatprep.subr.mxu0 0.0
    %1387 = vmatpush1.msra.mxu0 0.0
    %1388 = vmatprep.subr.mxu0 0.0
    %1389 = vmatpush1.msra.mxu0 0.0
    %1390 = vmatprep.subr.mxu0 0.0
    %1391 = vmatpush1.msra.mxu0 0.0
    %1392 = vmatprep.mubr.f32.mxu0 0.0
    %1393 = vmatmul.mubr.f32.gmra.mrb[0].mxu0 %v1326
    %v1394 = vpop.f32.mrb[0].mxu0
    %v1395 = vadd.f32 0.0, %v1394
    %v1396 = vpop.f32.mrb[0].mxu0
    %1397 = vdwg.mxu0
    %v1399 = vrot.slane %v1297, 4
    %v1401 = vadd.f32 %v126, %v1399
    %v1402 = vtanh.pop %v1401
    %v1403 = vmul.f32 %v1402, 0.5
    %v1404 = vadd.f32 %v1403, 0.5
    %v1406 = vrot.slane %v1217, 6
    %v1408 = vmul.f32 %v1404, %v1406
    %1410 = vrot.lane.b32.xlu0 %v1402, 32
    %v1411 = vpop.permute.xlu0 %1410
    %v1413 = vmul.f32 %v1404, %v1411
    %1415 = vrot.lane.b32.xlu0 %v1413, 32
    %v1416 = vpop.permute.xlu0 %1415
    %v1418 = vadd.f32 %v1408, %v1416
    %v1419 = vtanh.pop %v1418
    %1421 = vrot.lane.b32.xlu0 %v1419, 32
    %v1422 = vpop.permute.xlu0 %1421
    %v1424 = vmul.f32 %v1404, %v1422
    %v1426 = vrot.slane %v1424, 4
    %1427 = vrot.lane.b32.xlu0 %v1426, 64
    %v1428 = vpop.permute.xlu0 %1427
    %v1429 = vsel %vm129, %v1428, 0
    %1431 = vmatprep.subr.mxu0 %v29
    %1432 = vmatpush1.msra.mxu0 %v28
    %1433 = vmatprep.subr.mxu0 %v31
    %1434 = vmatpush1.msra.mxu0 %v30
    %1435 = vmatprep.subr.mxu0 %v33
    %1436 = vmatpush1.msra.mxu0 %v32
    %1437 = vmatprep.subr.mxu0 %v35
    %1438 = vmatpush1.msra.mxu0 %v34
    %1439 = vmatprep.subr.mxu0 0.0
    %1440 = vmatpush1.msra.mxu0 0.0
    %1441 = vmatprep.subr.mxu0 0.0
    %1442 = vmatpush1.msra.mxu0 0.0
    %1443 = vmatprep.subr.mxu0 0.0
    %1444 = vmatpush1.msra.mxu0 0.0
    %1445 = vmatprep.subr.mxu0 0.0
    %1446 = vmatpush1.msra.mxu0 0.0
    %1447 = vmatprep.subr.mxu0 0.0
    %1448 = vmatpush1.msra.mxu0 0.0
    %1449 = vmatprep.subr.mxu0 0.0
    %1450 = vmatpush1.msra.mxu0 0.0
    %1451 = vmatprep.subr.mxu0 0.0
    %1452 = vmatpush1.msra.mxu0 0.0
    %1453 = vmatprep.subr.mxu0 0.0
    %1454 = vmatpush1.msra.mxu0 0.0
    %1455 = vmatprep.subr.mxu0 0.0
    %1456 = vmatpush1.msra.mxu0 0.0
    %1457 = vmatprep.subr.mxu0 0.0
    %1458 = vmatpush1.msra.mxu0 0.0
    %1459 = vmatprep.subr.mxu0 0.0
    %1460 = vmatpush1.msra.mxu0 0.0
    %1461 = vmatprep.subr.mxu0 0.0
    %1462 = vmatpush1.msra.mxu0 0.0
    %1463 = vmatprep.subr.mxu0 0.0
    %1464 = vmatpush1.msra.mxu0 0.0
    %1465 = vmatprep.subr.mxu0 0.0
    %1466 = vmatpush1.msra.mxu0 0.0
    %1467 = vmatprep.subr.mxu0 0.0
    %1468 = vmatpush1.msra.mxu0 0.0
    %1469 = vmatprep.subr.mxu0 0.0
    %1470 = vmatpush1.msra.mxu0 0.0
    %1471 = vmatprep.subr.mxu0 0.0
    %1472 = vmatpush1.msra.mxu0 0.0
    %1473 = vmatprep.subr.mxu0 0.0
    %1474 = vmatpush1.msra.mxu0 0.0
    %1475 = vmatprep.subr.mxu0 0.0
    %1476 = vmatpush1.msra.mxu0 0.0
    %1477 = vmatprep.subr.mxu0 0.0
    %1478 = vmatpush1.msra.mxu0 0.0
    %1479 = vmatprep.subr.mxu0 0.0
    %1480 = vmatpush1.msra.mxu0 0.0
    %1481 = vmatprep.subr.mxu0 0.0
    %1482 = vmatpush1.msra.mxu0 0.0
    %1483 = vmatprep.subr.mxu0 0.0
    %1484 = vmatpush1.msra.mxu0 0.0
    %1485 = vmatprep.subr.mxu0 0.0
    %1486 = vmatpush1.msra.mxu0 0.0
    %1487 = vmatprep.subr.mxu0 0.0
    %1488 = vmatpush1.msra.mxu0 0.0
    %1489 = vmatprep.subr.mxu0 0.0
    %1490 = vmatpush1.msra.mxu0 0.0
    %1491 = vmatprep.subr.mxu0 0.0
    %1492 = vmatpush1.msra.mxu0 0.0
    %1493 = vmatprep.subr.mxu0 0.0
    %1494 = vmatpush1.msra.mxu0 0.0
    %1495 = vmatprep.mubr.f32.mxu0 0.0
    %1496 = vmatmul.mubr.f32.gmra.mrb[0].mxu0 %v1429
    %v1497 = vpop.f32.mrb[0].mxu0
    %v1498 = vadd.f32 0.0, %v1497
    %v1499 = vpop.f32.mrb[0].mxu0
    %v1500 = vadd.f32 0.0, %v1499
    %1501 = vdwg.mxu0
    %v1502 = vadd.f32 %v1500, %v1395
    %v1503 = vadd.f32 %v1502, %v40
    %v1504 = vtanh.pop %v1503
    %v1505 = vmul.f32 %v1504, 0.5
    %v1506 = vadd.f32 %v1505, 0.5
    %v1507 = vmul.f32 %v1506, %v1316
    %1509 = vrot.lane.b32.xlu0 %v1504, 32
    %v1510 = vpop.permute.xlu0 %1509
    %v1512 = vmul.f32 %v1506, %v1510
    %1514 = vrot.lane.b32.xlu0 %v1512, 32
    %v1515 = vpop.permute.xlu0 %1514
    %v1517 = vadd.f32 %v1507, %v1515
    %v1518 = vtanh.pop %v1517
    %1520 = vrot.lane.b32.xlu0 %v1518, 32
    %v1521 = vpop.permute.xlu0 %1520
    %v1523 = vmul.f32 %v1506, %v1521
    %1525 = vrot.lane.b32.xlu0 %v1523, 64
    %v1526 = vpop.permute.xlu0 %1525
    %v1527 = vsel %vm129, %v1526, 0
    %1529 = vmatprep.subr.mxu0 0.0
    %1530 = vmatpush1.msra.mxu0 %v36
    %1531 = vmatprep.subr.mxu0 0.0
    %1532 = vmatpush1.msra.mxu0 %v37
    %1533 = vmatprep.subr.mxu0 0.0
    %1534 = vmatpush1.msra.mxu0 %v38
    %1535 = vmatprep.subr.mxu0 0.0
    %1536 = vmatpush1.msra.mxu0 %v39
    %1537 = vmatprep.subr.mxu0 0.0
    %1538 = vmatpush1.msra.mxu0 0.0
    %1539 = vmatprep.subr.mxu0 0.0
    %1540 = vmatpush1.msra.mxu0 0.0
    %1541 = vmatprep.subr.mxu0 0.0
    %1542 = vmatpush1.msra.mxu0 0.0
    %1543 = vmatprep.subr.mxu0 0.0
    %1544 = vmatpush1.msra.mxu0 0.0
    %1545 = vmatprep.subr.mxu0 0.0
    %1546 = vmatpush1.msra.mxu0 0.0
    %1547 = vmatprep.subr.mxu0 0.0
    %1548 = vmatpush1.msra.mxu0 0.0
    %1549 = vmatprep.subr.mxu0 0.0
    %1550 = vmatpush1.msra.mxu0 0.0
    %1551 = vmatprep.subr.mxu0 0.0
    %1552 = vmatpush1.msra.mxu0 0.0
    %1553 = vmatprep.subr.mxu0 0.0
    %1554 = vmatpush1.msra.mxu0 0.0
    %1555 = vmatprep.subr.mxu0 0.0
    %1556 = vmatpush1.msra.mxu0 0.0
    %1557 = vmatprep.subr.mxu0 0.0
    %1558 = vmatpush1.msra.mxu0 0.0
    %1559 = vmatprep.subr.mxu0 0.0
    %1560 = vmatpush1.msra.mxu0 0.0
    %1561 = vmatprep.subr.mxu0 0.0
    %1562 = vmatpush1.msra.mxu0 0.0
    %1563 = vmatprep.subr.mxu0 0.0
    %1564 = vmatpush1.msra.mxu0 0.0
    %1565 = vmatprep.subr.mxu0 0.0
    %1566 = vmatpush1.msra.mxu0 0.0
    %1567 = vmatprep.subr.mxu0 0.0
    %1568 = vmatpush1.msra.mxu0 0.0
    %1569 = vmatprep.subr.mxu0 0.0
    %1570 = vmatpush1.msra.mxu0 0.0
    %1571 = vmatprep.subr.mxu0 0.0
    %1572 = vmatpush1.msra.mxu0 0.0
    %1573 = vmatprep.subr.mxu0 0.0
    %1574 = vmatpush1.msra.mxu0 0.0
    %1575 = vmatprep.subr.mxu0 0.0
    %1576 = vmatpush1.msra.mxu0 0.0
    %1577 = vmatprep.subr.mxu0 0.0
    %1578 = vmatpush1.msra.mxu0 0.0
    %1579 = vmatprep.subr.mxu0 0.0
    %1580 = vmatpush1.msra.mxu0 0.0
    %1581 = vmatprep.subr.mxu0 0.0
    %1582 = vmatpush1.msra.mxu0 0.0
    %1583 = vmatprep.subr.mxu0 0.0
    %1584 = vmatpush1.msra.mxu0 0.0
    %1585 = vmatprep.subr.mxu0 0.0
    %1586 = vmatpush1.msra.mxu0 0.0
    %1587 = vmatprep.subr.mxu0 0.0
    %1588 = vmatpush1.msra.mxu0 0.0
    %1589 = vmatprep.subr.mxu0 0.0
    %1590 = vmatpush1.msra.mxu0 0.0
    %1591 = vmatprep.subr.mxu0 0.0
    %1592 = vmatpush1.msra.mxu0 0.0
    %1593 = vmatprep.mubr.f32.mxu0 0.0
    %1594 = vmatmul.mubr.f32.gmra.mrb[0].mxu0 %v1527
    %v1595 = vpop.f32.mrb[0].mxu0
    %v1596 = vadd.f32 0.0, %v1595
    %v1597 = vpop.f32.mrb[0].mxu0
    %1598 = vdwg.mxu0
    %v1600 = vrot.slane %v1498, 2
    %v1602 = vadd.f32 %v126, %v1600
    %v1603 = vtanh.pop %v1602
    %v1604 = vmul.f32 %v1603, 0.5
    %v1605 = vadd.f32 %v1604, 0.5
    %v1607 = vrot.slane %v1418, 6
    %v1609 = vmul.f32 %v1605, %v1607
    %1611 = vrot.lane.b32.xlu0 %v1603, 32
    %v1612 = vpop.permute.xlu0 %1611
    %v1614 = vmul.f32 %v1605, %v1612
    %1616 = vrot.lane.b32.xlu0 %v1614, 32
    %v1617 = vpop.permute.xlu0 %1616
    %v1619 = vadd.f32 %v1609, %v1617
    %v1620 = vtanh.pop %v1619
    %1622 = vrot.lane.b32.xlu0 %v1620, 32
    %v1623 = vpop.permute.xlu0 %1622
    %v1625 = vmul.f32 %v1605, %v1623
    %v1627 = vrot.slane %v1625, 6
    %1628 = vrot.lane.b32.xlu0 %v1627, 64
    %v1629 = vpop.permute.xlu0 %1628
    %v1630 = vsel %vm129, %v1629, 0
    %1632 = vmatprep.subr.mxu0 %v29
    %1633 = vmatpush1.msra.mxu0 %v28
    %1634 = vmatprep.subr.mxu0 %v31
    %1635 = vmatpush1.msra.mxu0 %v30
    %1636 = vmatprep.subr.mxu0 %v33
    %1637 = vmatpush1.msra.mxu0 %v32
    %1638 = vmatprep.subr.mxu0 %v35
    %1639 = vmatpush1.msra.mxu0 %v34
    %1640 = vmatprep.subr.mxu0 0.0
    %1641 = vmatpush1.msra.mxu0 0.0
    %1642 = vmatprep.subr.mxu0 0.0
    %1643 = vmatpush1.msra.mxu0 0.0
    %1644 = vmatprep.subr.mxu0 0.0
    %1645 = vmatpush1.msra.mxu0 0.0
    %1646 = vmatprep.subr.mxu0 0.0
    %1647 = vmatpush1.msra.mxu0 0.0
    %1648 = vmatprep.subr.mxu0 0.0
    %1649 = vmatpush1.msra.mxu0 0.0
    %1650 = vmatprep.subr.mxu0 0.0
    %1651 = vmatpush1.msra.mxu0 0.0
    %1652 = vmatprep.subr.mxu0 0.0
    %1653 = vmatpush1.msra.mxu0 0.0
    %1654 = vmatprep.subr.mxu0 0.0
    %1655 = vmatpush1.msra.mxu0 0.0
    %1656 = vmatprep.subr.mxu0 0.0
    %1657 = vmatpush1.msra.mxu0 0.0
    %1658 = vmatprep.subr.mxu0 0.0
    %1659 = vmatpush1.msra.mxu0 0.0
    %1660 = vmatprep.subr.mxu0 0.0
    %1661 = vmatpush1.msra.mxu0 0.0
    %1662 = vmatprep.subr.mxu0 0.0
    %1663 = vmatpush1.msra.mxu0 0.0
    %1664 = vmatprep.subr.mxu0 0.0
    %1665 = vmatpush1.msra.mxu0 0.0
    %1666 = vmatprep.subr.mxu0 0.0
    %1667 = vmatpush1.msra.mxu0 0.0
    %1668 = vmatprep.subr.mxu0 0.0
    %1669 = vmatpush1.msra.mxu0 0.0
    %1670 = vmatprep.subr.mxu0 0.0
    %1671 = vmatpush1.msra.mxu0 0.0
    %1672 = vmatprep.subr.mxu0 0.0
    %1673 = vmatpush1.msra.mxu0 0.0
    %1674 = vmatprep.subr.mxu0 0.0
    %1675 = vmatpush1.msra.mxu0 0.0
    %1676 = vmatprep.subr.mxu0 0.0
    %1677 = vmatpush1.msra.mxu0 0.0
    %1678 = vmatprep.subr.mxu0 0.0
    %1679 = vmatpush1.msra.mxu0 0.0
    %1680 = vmatprep.subr.mxu0 0.0
    %1681 = vmatpush1.msra.mxu0 0.0
    %1682 = vmatprep.subr.mxu0 0.0
    %1683 = vmatpush1.msra.mxu0 0.0
    %1684 = vmatprep.subr.mxu0 0.0
    %1685 = vmatpush1.msra.mxu0 0.0
    %1686 = vmatprep.subr.mxu0 0.0
    %1687 = vmatpush1.msra.mxu0 0.0
    %1688 = vmatprep.subr.mxu0 0.0
    %1689 = vmatpush1.msra.mxu0 0.0
    %1690 = vmatprep.subr.mxu0 0.0
    %1691 = vmatpush1.msra.mxu0 0.0
    %1692 = vmatprep.subr.mxu0 0.0
    %1693 = vmatpush1.msra.mxu0 0.0
    %1694 = vmatprep.subr.mxu0 0.0
    %1695 = vmatpush1.msra.mxu0 0.0
    %1696 = vmatprep.mubr.f32.mxu0 0.0
    %1697 = vmatmul.mubr.f32.gmra.mrb[0].mxu0 %v1630
    %v1698 = vpop.f32.mrb[0].mxu0
    %v1699 = vpop.f32.mrb[0].mxu0
    %v1700 = vadd.f32 0.0, %v1699
    %1701 = vdwg.mxu0
    %v1702 = vadd.f32 %v1700, %v1596
    %v1703 = vadd.f32 %v1702, %v40
    %v1704 = vtanh.pop %v1703
    %v1705 = vmul.f32 %v1704, 0.5
    %v1706 = vadd.f32 %v1705, 0.5
    %v1707 = vmul.f32 %v1706, %v1517
    %1709 = vrot.lane.b32.xlu0 %v1704, 32
    %v1710 = vpop.permute.xlu0 %1709
    %v1712 = vmul.f32 %v1706, %v1710
    %1714 = vrot.lane.b32.xlu0 %v1712, 32
    %v1715 = vpop.permute.xlu0 %1714
    %v1717 = vadd.f32 %v1707, %v1715
    %v1718 = vtanh.pop %v1717
    %1720 = vrot.lane.b32.xlu0 %v1718, 32
    %v1721 = vpop.permute.xlu0 %1720
    %v1723 = vmul.f32 %v1706, %v1721
    %1725 = vrot.lane.b32.xlu0 %v1723, 64
    %v1726 = vpop.permute.xlu0 %1725
    %vm1728 = vcmask 254976
    %v1729 = vsel %vm1728, %v1726, 0.0
    %1730 = vadd.xlane.f32.xlu0 %v1729
    %v1731 = vpop.xlane.xlu0 %1730
    %v1732 = vrcp.pop 32.0
    %v1733 = vmul.f32 %v1731, %v1732
    %v1734 = vsub.f32 %v1723, %v1733
    %v1735 = vmul.f32 %v1734, %v1734
    %1737 = vrot.lane.b32.xlu0 %v1735, 64
    %v1738 = vpop.permute.xlu0 %1737
    %v1740 = vsel %vm1728, %v1738, 0.0
    %1741 = vadd.xlane.f32.xlu0 %v1740
    %v1742 = vpop.xlane.xlu0 %1741
    %v1743 = vmul.f32 %v1742, %v1732
    %v1744 = vadd.f32 %v1743, 1e-05
    %v1745 = vrsqrt.pop %v1744
    %v1746 = vmul.f32 %v1734, %v1745
    %v1747 = vld [vmem:[#allocation2 + $0xb0] ss:$0 sm:$0xff]
    %1749 = vrot.lane.b32.xlu0 %v1747, 64
    %v1750 = vpop.permute.xlu0 %1749
    %v1752 = vmul.f32 %v1746, %v1750
    %v1753 = vld [vmem:[#allocation2 + $0xc0] ss:$0 sm:$0xff]
    %1755 = vrot.lane.b32.xlu0 %v1753, 64
    %v1756 = vpop.permute.xlu0 %1755
    %v1758 = vadd.f32 %v1752, %v1756
    %v1759 = vld [vmem:[#allocation2 + $0xd0] sm:$0xff]
    %v1760 = vld [vmem:[#allocation2 + $0xe0] sm:$0xff]
    %v1761 = vld [vmem:[#allocation2 + $0xf0] sm:$0xff]
    %v1762 = vld [vmem:[#allocation2 + $0x100] sm:$0xff]
    %v1763 = vld [vmem:[#allocation2 + $0x110] ss:$0 sm:$0xff]
    %1765 = vrot.lane.b32.xlu0 %v1758, 64
    %v1766 = vpop.permute.xlu0 %1765
    %v1767 = vsel %vm129, %v1766, 0
    %1769 = vmatprep.subr.mxu0 0.0
    %1770 = vmatpush1.msra.mxu0 %v1759
    %1771 = vmatprep.subr.mxu0 0.0
    %1772 = vmatpush1.msra.mxu0 %v1760
    %1773 = vmatprep.subr.mxu0 0.0
    %1774 = vmatpush1.msra.mxu0 %v1761
    %1775 = vmatprep.subr.mxu0 0.0
    %1776 = vmatpush1.msra.mxu0 %v1762
    %1777 = vmatprep.subr.mxu0 0.0
    %1778 = vmatpush1.msra.mxu0 0.0
    %1779 = vmatprep.subr.mxu0 0.0
    %1780 = vmatpush1.msra.mxu0 0.0
    %1781 = vmatprep.subr.mxu0 0.0
    %1782 = vmatpush1.msra.mxu0 0.0
    %1783 = vmatprep.subr.mxu0 0.0
    %1784 = vmatpush1.msra.mxu0 0.0
    %1785 = vmatprep.subr.mxu0 0.0
    %1786 = vmatpush1.msra.mxu0 0.0
    %1787 = vmatprep.subr.mxu0 0.0
    %1788 = vmatpush1.msra.mxu0 0.0
    %1789 = vmatprep.subr.mxu0 0.0
    %1790 = vmatpush1.msra.mxu0 0.0
    %1791 = vmatprep.subr.mxu0 0.0
    %1792 = vmatpush1.msra.mxu0 0.0
    %1793 = vmatprep.subr.mxu0 0.0
    %1794 = vmatpush1.msra.mxu0 0.0
    %1795 = vmatprep.subr.mxu0 0.0
    %1796 = vmatpush1.msra.mxu0 0.0
    %1797 = vmatprep.subr.mxu0 0.0
    %1798 = vmatpush1.msra.mxu0 0.0
    %1799 = vmatprep.subr.mxu0 0.0
    %1800 = vmatpush1.msra.mxu0 0.0
    %1801 = vmatprep.subr.mxu0 0.0
    %1802 = vmatpush1.msra.mxu0 0.0
    %1803 = vmatprep.subr.mxu0 0.0
    %1804 = vmatpush1.msra.mxu0 0.0
    %1805 = vmatprep.subr.mxu0 0.0
    %1806 = vmatpush1.msra.mxu0 0.0
    %1807 = vmatprep.subr.mxu0 0.0
    %1808 = vmatpush1.msra.mxu0 0.0
    %1809 = vmatprep.subr.mxu0 0.0
    %1810 = vmatpush1.msra.mxu0 0.0
    %1811 = vmatprep.subr.mxu0 0.0
    %1812 = vmatpush1.msra.mxu0 0.0
    %1813 = vmatprep.subr.mxu0 0.0
    %1814 = vmatpush1.msra.mxu0 0.0
    %1815 = vmatprep.subr.mxu0 0.0
    %1816 = vmatpush1.msra.mxu0 0.0
    %1817 = vmatprep.subr.mxu0 0.0
    %1818 = vmatpush1.msra.mxu0 0.0
    %1819 = vmatprep.subr.mxu0 0.0
    %1820 = vmatpush1.msra.mxu0 0.0
    %1821 = vmatprep.subr.mxu0 0.0
    %1822 = vmatpush1.msra.mxu0 0.0
    %1823 = vmatprep.subr.mxu0 0.0
    %1824 = vmatpush1.msra.mxu0 0.0
    %1825 = vmatprep.subr.mxu0 0.0
    %1826 = vmatpush1.msra.mxu0 0.0
    %1827 = vmatprep.subr.mxu0 0.0
    %1828 = vmatpush1.msra.mxu0 0.0
    %1829 = vmatprep.subr.mxu0 0.0
    %1830 = vmatpush1.msra.mxu0 0.0
    %1831 = vmatprep.subr.mxu0 0.0
    %1832 = vmatpush1.msra.mxu0 0.0
    %1833 = vmatprep.mubr.f32.mxu0 0.0
    %1834 = vmatmul.mubr.f32.gmra.mrb[0].mxu0 %v1767
    %v1835 = vpop.f32.mrb[0].mxu0
    %v1836 = vadd.f32 %v1763, %v1835
    %v1837 = vpop.f32.mrb[0].mxu0
    %1838 = vdwg.mxu0
    %v1839 = vmax.f32 %v1836, 0.0
    %v1840 = vld [vmem:[#allocation2 + $0x120] sm:$0xff]
    %v1841 = vld [vmem:[#allocation2 + $0x130] sm:$0xff]
    %v1842 = vld [vmem:[#allocation2 + $0x140] sm:$0xff]
    %v1843 = vld [vmem:[#allocation2 + $0x150] sm:$0xff]
    %v1844 = vld [vmem:[#allocation2 + $0x160] sm:$0xff]
    %v1845 = vld [vmem:[#allocation2 + $0x170] sm:$0xff]
    %v1846 = vld [vmem:[#allocation2 + $0x180] sm:$0xff]
    %v1847 = vld [vmem:[#allocation2 + $0x190] sm:$0xff]
    %v1848 = vld [vmem:[#allocation2 + $0x1a0] ss:$0 sm:$0xff]
    %vm1849 = vcmask 523264
    %v1851 = vsel %vm1849, %v1839, 0
    %1853 = vmatprep.subr.mxu0 0.0
    %1854 = vmatpush1.msra.mxu0 %v1840
    %1855 = vmatprep.subr.mxu0 0.0
    %1856 = vmatpush1.msra.mxu0 %v1841
    %1857 = vmatprep.subr.mxu0 0.0
    %1858 = vmatpush1.msra.mxu0 %v1842
    %1859 = vmatprep.subr.mxu0 0.0
    %1860 = vmatpush1.msra.mxu0 %v1843
    %1861 = vmatprep.subr.mxu0 0.0
    %1862 = vmatpush1.msra.mxu0 %v1844
    %1863 = vmatprep.subr.mxu0 0.0
    %1864 = vmatpush1.msra.mxu0 %v1845
    %1865 = vmatprep.subr.mxu0 0.0
    %1866 = vmatpush1.msra.mxu0 %v1846
    %1867 = vmatprep.subr.mxu0 0.0
    %1868 = vmatpush1.msra.mxu0 %v1847
    %1869 = vmatprep.subr.mxu0 0.0
    %1870 = vmatpush1.msra.mxu0 0.0
    %1871 = vmatprep.subr.mxu0 0.0
    %1872 = vmatpush1.msra.mxu0 0.0
    %1873 = vmatprep.subr.mxu0 0.0
    %1874 = vmatpush1.msra.mxu0 0.0
    %1875 = vmatprep.subr.mxu0 0.0
    %1876 = vmatpush1.msra.mxu0 0.0
    %1877 = vmatprep.subr.mxu0 0.0
    %1878 = vmatpush1.msra.mxu0 0.0
    %1879 = vmatprep.subr.mxu0 0.0
    %1880 = vmatpush1.msra.mxu0 0.0
    %1881 = vmatprep.subr.mxu0 0.0
    %1882 = vmatpush1.msra.mxu0 0.0
    %1883 = vmatprep.subr.mxu0 0.0
    %1884 = vmatpush1.msra.mxu0 0.0
    %1885 = vmatprep.subr.mxu0 0.0
    %1886 = vmatpush1.msra.mxu0 0.0
    %1887 = vmatprep.subr.mxu0 0.0
    %1888 = vmatpush1.msra.mxu0 0.0
    %1889 = vmatprep.subr.mxu0 0.0
    %1890 = vmatpush1.msra.mxu0 0.0
    %1891 = vmatprep.subr.mxu0 0.0
    %1892 = vmatpush1.msra.mxu0 0.0
    %1893 = vmatprep.subr.mxu0 0.0
    %1894 = vmatpush1.msra.mxu0 0.0
    %1895 = vmatprep.subr.mxu0 0.0
    %1896 = vmatpush1.msra.mxu0 0.0
    %1897 = vmatprep.subr.mxu0 0.0
    %1898 = vmatpush1.msra.mxu0 0.0
    %1899 = vmatprep.subr.mxu0 0.0
    %1900 = vmatpush1.msra.mxu0 0.0
    %1901 = vmatprep.subr.mxu0 0.0
    %1902 = vmatpush1.msra.mxu0 0.0
    %1903 = vmatprep.subr.mxu0 0.0
    %1904 = vmatpush1.msra.mxu0 0.0
    %1905 = vmatprep.subr.mxu0 0.0
    %1906 = vmatpush1.msra.mxu0 0.0
    %1907 = vmatprep.subr.mxu0 0.0
    %1908 = vmatpush1.msra.mxu0 0.0
    %1909 = vmatprep.subr.mxu0 0.0
    %1910 = vmatpush1.msra.mxu0 0.0
    %1911 = vmatprep.subr.mxu0 0.0
    %1912 = vmatpush1.msra.mxu0 0.0
    %1913 = vmatprep.subr.mxu0 0.0
    %1914 = vmatpush1.msra.mxu0 0.0
    %1915 = vmatprep.subr.mxu0 0.0
    %1916 = vmatpush1.msra.mxu0 0.0
    %1917 = vmatprep.mubr.f32.mxu0 0.0
    %1918 = vmatmul.mubr.f32.gmra.mrb[0].mxu0 %v1851
    %v1919 = vpop.f32.mrb[0].mxu0
    %v1920 = vadd.f32 %v1848, %v1919
    %v1921 = vpop.f32.mrb[0].mxu0
    %1922 = vdwg.mxu0
    %v1923 = vmax.f32 %v1920, 0.0
    %v1924 = vld [vmem:[#allocation2 + $0x1b0] sm:$0xff]
    %v1925 = vld [vmem:[#allocation2 + $0x1c0] sm:$0xff]
    %v1926 = vld [vmem:[#allocation2 + $0x1d0] sm:$0xff]
    %v1927 = vld [vmem:[#allocation2 + $0x1e0] sm:$0xff]
    %v1928 = vld [vmem:[#allocation2 + $0x1f0] ss:$0 sm:$0xff]
    %v1930 = vsel %vm129, %v1923, 0
    %1932 = vmatprep.subr.mxu0 0.0
    %1933 = vmatpush1.msra.mxu0 %v1924
    %1934 = vmatprep.subr.mxu0 0.0
    %1935 = vmatpush1.msra.mxu0 %v1925
    %1936 = vmatprep.subr.mxu0 0.0
    %1937 = vmatpush1.msra.mxu0 %v1926
    %1938 = vmatprep.subr.mxu0 0.0
    %1939 = vmatpush1.msra.mxu0 %v1927
    %1940 = vmatprep.subr.mxu0 0.0
    %1941 = vmatpush1.msra.mxu0 0.0
    %1942 = vmatprep.subr.mxu0 0.0
    %1943 = vmatpush1.msra.mxu0 0.0
    %1944 = vmatprep.subr.mxu0 0.0
    %1945 = vmatpush1.msra.mxu0 0.0
    %1946 = vmatprep.subr.mxu0 0.0
    %1947 = vmatpush1.msra.mxu0 0.0
    %1948 = vmatprep.subr.mxu0 0.0
    %1949 = vmatpush1.msra.mxu0 0.0
    %1950 = vmatprep.subr.mxu0 0.0
    %1951 = vmatpush1.msra.mxu0 0.0
    %1952 = vmatprep.subr.mxu0 0.0
    %1953 = vmatpush1.msra.mxu0 0.0
    %1954 = vmatprep.subr.mxu0 0.0
    %1955 = vmatpush1.msra.mxu0 0.0
    %1956 = vmatprep.subr.mxu0 0.0
    %1957 = vmatpush1.msra.mxu0 0.0
    %1958 = vmatprep.subr.mxu0 0.0
    %1959 = vmatpush1.msra.mxu0 0.0
    %1960 = vmatprep.subr.mxu0 0.0
    %1961 = vmatpush1.msra.mxu0 0.0
    %1962 = vmatprep.subr.mxu0 0.0
    %1963 = vmatpush1.msra.mxu0 0.0
    %1964 = vmatprep.subr.mxu0 0.0
    %1965 = vmatpush1.msra.mxu0 0.0
    %1966 = vmatprep.subr.mxu0 0.0
    %1967 = vmatpush1.msra.mxu0 0.0
    %1968 = vmatprep.subr.mxu0 0.0
    %1969 = vmatpush1.msra.mxu0 0.0
    %1970 = vmatprep.subr.mxu0 0.0
    %1971 = vmatpush1.msra.mxu0 0.0
    %1972 = vmatprep.subr.mxu0 0.0
    %1973 = vmatpush1.msra.mxu0 0.0
    %1974 = vmatprep.subr.mxu0 0.0
    %1975 = vmatpush1.msra.mxu0 0.0
    %1976 = vmatprep.subr.mxu0 0.0
    %1977 = vmatpush1.msra.mxu0 0.0
    %1978 = vmatprep.subr.mxu0 0.0
    %1979 = vmatpush1.msra.mxu0 0.0
    %1980 = vmatprep.subr.mxu0 0.0
    %1981 = vmatpush1.msra.mxu0 0.0
    %1982 = vmatprep.subr.mxu0 0.0
    %1983 = vmatpush1.msra.mxu0 0.0
    %1984 = vmatprep.subr.mxu0 0.0
    %1985 = vmatpush1.msra.mxu0 0.0
    %1986 = vmatprep.subr.mxu0 0.0
    %1987 = vmatpush1.msra.mxu0 0.0
    %1988 = vmatprep.subr.mxu0 0.0
    %1989 = vmatpush1.msra.mxu0 0.0
    %1990 = vmatprep.subr.mxu0 0.0
    %1991 = vmatpush1.msra.mxu0 0.0
    %1992 = vmatprep.subr.mxu0 0.0
    %1993 = vmatpush1.msra.mxu0 0.0
    %1994 = vmatprep.subr.mxu0 0.0
    %1995 = vmatpush1.msra.mxu0 0.0
    %1996 = vmatprep.mubr.f32.mxu0 0.0
    %1997 = vmatmul.mubr.f32.gmra.mrb[0].mxu0 %v1930
    %v1998 = vpop.f32.mrb[0].mxu0
    %v1999 = vadd.f32 %v1928, %v1998
    %v2000 = vpop.f32.mrb[0].mxu0
    %2001 = vdwg.mxu0
    %vm2002 = vcmask 25600
    %2003 = vst.msk [vmem:[#allocation5] sm:$0x3] %vm2002, %v1999
    // Predicated region
    $region14: #{lstm2_forecast.1} parent=1 // pred_check
      _
    $region15: #{lstm2_forecast.1} parent=1 // pred_check_branch
      %2005 = sbr.rel (0) target = $region17
    $region16: #{lstm2_forecast.1} parent=1 // pred_region
      %s2007 = ssub.s32 32, 32
      %2008 = vsyncadd [#allocation4], %s2007
      %s2010 = sshll.u32 [#allocation5], 4
      %s2011 = int_to_ptr.vmem [resolvable:$true] %s2010
      %2013 = dma.vmem_to_hbm [thread:$0]  %s2011, 32, %s2, [#allocation4]
    $region17: #{lstm2_forecast.1} parent=1 // pred_fallthru
      _
    // Predicated region
    $region18: #{lstm2_forecast.1} parent=1 // pred_check
      _
    $region19: #{lstm2_forecast.1} parent=1 // pred_check_branch
      %2015 = sbr.rel (0) target = $region21
    $region20: #{lstm2_forecast.1} parent=1 // pred_region
      %2016 = dma.done [#allocation4], 32
    $region21: #{lstm2_forecast.1} parent=1 // pred_fallthru
      _
    %2017 = vsyncpa [#allocation3], 1
    %2018 = vsyncpa [#allocation4], 1

</llo_original>
